<compile_context>
chip_gen: v6e
topology: v6e:2x2x1
jax: 0.10.0
libtpu: 0.0.40
codegen_flags: <defaults>
</compile_context>

<pallas_src>
import jax
import jax.numpy as jnp
import numpy as np
from jax.experimental import pallas as pl
from jax.experimental.pallas import tpu as pltpu

NZ = 32          # latent size
NFT = 2          # base feature maps
C1 = NFT * 2     # layer-1 output channels (4)
C2 = NFT         # layer-2 output channels (2)
S1, S2, S3 = 7, 14, 28        # spatial sizes after layers 1/2/3
BLK1 = 128       # lanes per layer-1 channel block (49 valid, rest zero-backed)
BLK2 = 256       # lanes per layer-2 channel block (196 valid, rest zero-backed)
BN_EPS = 1e-5
VMEM_LIMIT = 32 * 1024 * 1024
MAX_FUSED_BATCH = 2048        # single-VMEM-block limit; see TODO above


# ----------------------------------------------------------------------------
# The fused kernel: 3 matmuls + training-mode BatchNorm + ReLU + Tanh
# ----------------------------------------------------------------------------
def _generator_kernel(z_ref, w1_ref, w2_ref, w3_ref,
                      g1_ref, b1_ref, g2_ref, b2_ref, o_ref):
    n = z_ref.shape[0]                                   # static batch size

    def bn_relu(h, channels, block, valid, g_ref, b_ref):
        """Training-mode BN (biased variance over the batch*spatial group) + ReLU.

        Each channel owns an aligned `block`-lane slab of `h`; only the first
        `valid` lanes are real data, the rest are exact zeros (their weight
        columns are zero), so sums over the full slab equal sums over the
        valid region and we just divide by the true count.  Garbage produced
        in padded lanes after the affine+ReLU is harmless: the next weight
        matrix has all-zero rows there.
        """
        cnt = float(valid * n)
        parts = []
        for c in range(channels):                        # tiny, unrolled at trace
            blk = h[:, c * block:(c + 1) * block]        # lane-tile aligned slice
            s1 = jnp.sum(jnp.sum(blk, axis=1, keepdims=True),
                         axis=0, keepdims=True)          # (1, 1)
            s2 = jnp.sum(jnp.sum(blk * blk, axis=1, keepdims=True),
                         axis=0, keepdims=True)          # (1, 1)
            mean = s1 / cnt
            var = s2 / cnt - mean * mean                 # biased (train-mode) var
            inv = jax.lax.rsqrt(var + BN_EPS)
            scale = g_ref[c] * inv                       # (1, 1)
            shift = b_ref[c] - mean * scale              # (1, 1)
            parts.append(jnp.maximum(blk * scale + shift, 0.0))
        return jnp.concatenate(parts, axis=1)            # aligned 128-lane pieces

    # Layer 1: ConvTranspose2d(32, 4, 7) on a 1x1 input == linear layer.
    h1 = jnp.dot(z_ref[...], w1_ref[...],
                 preferred_element_type=jnp.float32)     # (n, C1*128)
    a1 = bn_relu(h1, C1, BLK1, S1 * S1, g1_ref, b1_ref)

    # Layer 2: ConvTranspose2d(4, 2, 4, 2, 1) as a dense (512, 512) matrix.
    h2 = jnp.dot(a1.astype(jnp.bfloat16), w2_ref[...],
                 preferred_element_type=jnp.float32)     # (n, C2*256)
    a2 = bn_relu(h2, C2, BLK2, S2 * S2, g2_ref, b2_ref)

    # Layer 3: ConvTranspose2d(2, 1, 4, 2, 1) as a dense (512, 784) matrix.
    h3 = jnp.dot(a2.astype(jnp.bfloat16), w3_ref[...],
                 preferred_element_type=jnp.float32)     # (n, 784)
    o_ref[...] = jnp.tanh(h3)                            # single full-block store


# ----------------------------------------------------------------------------
# Init-time (numpy) weight packing: ConvTranspose2d -> dense matrix
# ----------------------------------------------------------------------------
def convT_as_matrix(w, hin, win, stride, pad, in_block, out_block):
    """PyTorch ConvTranspose2d weight (Cin, Cout, K, K), bias=False, as a dense
    matrix mapping the lane-padded input layout to the lane-padded output
    layout.

    row = ci*in_block  + i*win  + j   (input  channel block of in_block lanes)
    col = co*out_block + u*wout + v   (output channel block of out_block lanes)
    y[co, u, v] += x[ci, i, j] * w[ci, co, kh, kw]  with
        u = i*stride - pad + kh,  v = j*stride - pad + kw  (if in range).
    Unused (padding) rows / columns stay exactly zero.
    """
    w = np.asarray(w)
    cin, cout, k, _ = w.shape
    hout = (hin - 1) * stride - 2 * pad + k
    wout = (win - 1) * stride - 2 * pad + k
    m = np.zeros((cin * in_block, cout * out_block), np.float32)
    for ci in range(cin):
        for co in range(cout):
            for i in range(hin):
                for j in range(win):
                    r = ci * in_block + i * win + j
                    for kh in range(k):
                        u = i * stride - pad + kh
                        if not 0 <= u < hout:
                            continue
                        for kw in range(k):
                            v = j * stride - pad + kw
                            if not 0 <= v < wout:
                                continue
                            m[r, co * out_block + u * wout + v] = w[ci, co, kh, kw]
    return m


def init_params(key):
    k1, k2, k3 = jax.random.split(key, 3)
    # DCGAN-style N(0, 0.02) init, deterministic from the key.
    w1 = 0.02 * jax.random.normal(k1, (NZ, C1, 7, 7), jnp.float32)
    w2 = 0.02 * jax.random.normal(k2, (C1, C2, 4, 4), jnp.float32)
    w3 = 0.02 * jax.random.normal(k3, (C2, 1, 4, 4), jnp.float32)
    return {
        # pre-packed, lane-aligned, bf16 MXU operands
        "w1m": jnp.asarray(convT_as_matrix(w1, 1, 1, 1, 0, 1, BLK1), jnp.bfloat16),
        "w2m": jnp.asarray(convT_as_matrix(w2, S1, S1, 2, 1, BLK1, BLK2), jnp.bfloat16),
        "w3m": jnp.asarray(convT_as_matrix(w3, S2, S2, 2, 1, BLK2, S3 * S3), jnp.bfloat16),
        "g1": jnp.ones((C1,), jnp.float32), "b1": jnp.zeros((C1,), jnp.float32),
        "g2": jnp.ones((C2,), jnp.float32), "b2": jnp.zeros((C2,), jnp.float32),
        # raw PyTorch-layout weights kept only for the pure-JAX reference check
        "w1": w1, "w2": w2, "w3": w3,
    }


# ----------------------------------------------------------------------------
# Generator forward: one pallas_call, only trivial reshapes outside
# ----------------------------------------------------------------------------
@jax.jit
def generator_forward(z, params):
    n = z.shape[0]
    assert n <= MAX_FUSED_BATCH, "add batch-row grid + two-pass BN (see TODO)"
    z2 = z.reshape(n, NZ).astype(jnp.bfloat16)
    vmem = pl.BlockSpec(memory_space=pltpu.MemorySpace.VMEM)
    smem = pl.BlockSpec(memory_space=pltpu.MemorySpace.SMEM)
    flops = 2 * n * (NZ * C1 * BLK1 + C1 * BLK1 * C2 * BLK2 + C2 * BLK2 * S3 * S3)
    bytes_accessed = 2 * (z2.size + params["w1m"].size + params["w2m"].size
                          + params["w3m"].size) + 4 * n * S3 * S3 + 4 * (2 * C1 + 2 * C2)
    out = pl.pallas_call(
        _generator_kernel,
        out_shape=jax.ShapeDtypeStruct((n, S3 * S3), jnp.float32),
        in_specs=[vmem, vmem, vmem, vmem, smem, smem, smem, smem],
        out_specs=vmem,
        compiler_params=pltpu.CompilerParams(vmem_limit_bytes=VMEM_LIMIT),
        cost_estimate=pl.CostEstimate(flops=flops, transcendentals=n * S3 * S3,
                                      bytes_accessed=bytes_accessed),
    )(z2, params["w1m"], params["w2m"], params["w3m"],
      params["g1"], params["b1"], params["g2"], params["b2"])
    return out.reshape(n, 1, S3, S3)


# ----------------------------------------------------------------------------
# Pure-JAX reference (same bf16 quantization points) for a sanity check
# ----------------------------------------------------------------------------
def _convT_ref(x, w, stride, pad):
    k = w.shape[2]
    wt = jnp.flip(w, (2, 3)).transpose(1, 0, 2, 3)      # (Cout, Cin, k, k)
    return jax.lax.conv_general_dilated(
        x, wt, window_strides=(1, 1),
        padding=[(k - 1 - pad, k - 1 - pad)] * 2,
        lhs_dilation=(stride, stride),
        dimension_numbers=("NCHW", "OIHW", "NCHW"))


def _bn_relu_ref(x, gamma, beta):
    mean = jnp.mean(x, axis=(0, 2, 3), keepdims=True)
    var = jnp.mean(jnp.square(x - mean), axis=(0, 2, 3), keepdims=True)
    xhat = (x - mean) * jax.lax.rsqrt(var + BN_EPS)
    return jnp.maximum(xhat * gamma.reshape(1, -1, 1, 1)
                       + beta.reshape(1, -1, 1, 1), 0.0)


@jax.jit
def generator_reference(z, params):
    q = lambda a: a.astype(jnp.bfloat16).astype(jnp.float32)
    x = _convT_ref(q(z), q(params["w1"]), 1, 0)
    x = _bn_relu_ref(x, params["g1"], params["b1"])
    x = _convT_ref(q(x), q(params["w2"]), 2, 1)
    x = _bn_relu_ref(x, params["g2"], params["b2"])
    x = _convT_ref(q(x), q(params["w3"]), 2, 1)
    return jnp.tanh(x)


if __name__ == "__main__":
    key = jax.random.PRNGKey(0)
    kz, kp = jax.random.split(key)
    batch = 2
    z = jax.random.normal(kz, (batch, NZ, 1, 1), jnp.float32)   # latent, NCHW
    params = init_params(kp)

    out = jax.block_until_ready(generator_forward(z, params))

    assert out.shape == (batch, 1, 28, 28), out.shape
    assert bool(jnp.all(jnp.isfinite(out)))
    assert bool(jnp.all(jnp.abs(out) <= 1.0 + 1e-6))            # tanh range

    ref = jax.block_until_ready(generator_reference(z, params))
    max_err = float(jnp.max(jnp.abs(out - ref)))
    assert max_err < 1e-2, f"mismatch vs pure-JAX reference: {max_err}"

    print("KERNEL_OK")
</pallas_src>

<mosaic_0001>
module attributes {stable_mosaic.version = 11 : i64} {
  func.func @_generator_kernel(%arg0: memref<2x32xbf16, #tpu.memory_space<vmem>>, %arg1: memref<32x512xbf16, #tpu.memory_space<vmem>>, %arg2: memref<512x512xbf16, #tpu.memory_space<vmem>>, %arg3: memref<512x784xbf16, #tpu.memory_space<vmem>>, %arg4: memref<4xf32, #tpu.memory_space<smem>>, %arg5: memref<4xf32, #tpu.memory_space<smem>>, %arg6: memref<2xf32, #tpu.memory_space<smem>>, %arg7: memref<2xf32, #tpu.memory_space<smem>>, %arg8: memref<2x784xf32, #tpu.memory_space<vmem>>) attributes {dimension_semantics = [], scalar_prefetch = 0 : i64, scratch_operands = 0 : i64, tpu.core_type = #tpu.core_type<tc>} {
    %c0 = arith.constant 0 : index
    %c0_0 = arith.constant 0 : index
    %0 = vector.load %arg0[%c0, %c0_0] : memref<2x32xbf16, #tpu.memory_space<vmem>>, vector<2x32xbf16>
    %c0_1 = arith.constant 0 : index
    %c0_2 = arith.constant 0 : index
    %1 = vector.load %arg1[%c0_1, %c0_2] : memref<32x512xbf16, #tpu.memory_space<vmem>>, vector<32x512xbf16>
    %cst = arith.constant dense<0.000000e+00> : vector<2x512xf32>
    %2 = tpu.matmul %0, %1, %cst {dimension_numbers = #tpu.dot_dimension_numbers<[1], [0], [0], [1], [0, 0, 1, 1], [], []>} : vector<2x32xbf16>, vector<32x512xbf16>, vector<2x512xf32> -> vector<2x512xf32>
    %3 = vector.extract_strided_slice %2 {offsets = [0, 0], sizes = [2, 128], strides = [1, 1]} : vector<2x512xf32> to vector<2x128xf32>
    %cst_3 = arith.constant dense<0.000000e+00> : vector<2xf32>
    %4 = vector.multi_reduction <add>, %3, %cst_3 [1] : vector<2x128xf32> to vector<2xf32>
    %5 = vector.shape_cast %4 : vector<2xf32> to vector<2x1xf32>
    %cst_4 = arith.constant dense<0.000000e+00> : vector<1xf32>
    %6 = vector.multi_reduction <add>, %5, %cst_4 [0] : vector<2x1xf32> to vector<1xf32>
    %7 = vector.shape_cast %6 : vector<1xf32> to vector<1x1xf32>
    %8 = arith.mulf %3, %3 : vector<2x128xf32>
    %cst_5 = arith.constant dense<0.000000e+00> : vector<2xf32>
    %9 = vector.multi_reduction <add>, %8, %cst_5 [1] : vector<2x128xf32> to vector<2xf32>
    %10 = vector.shape_cast %9 : vector<2xf32> to vector<2x1xf32>
    %cst_6 = arith.constant dense<0.000000e+00> : vector<1xf32>
    %11 = vector.multi_reduction <add>, %10, %cst_6 [0] : vector<2x1xf32> to vector<1xf32>
    %12 = vector.shape_cast %11 : vector<1xf32> to vector<1x1xf32>
    %cst_7 = arith.constant 9.800000e+01 : f32
    %13 = vector.broadcast %cst_7 : f32 to vector<1x1xf32>
    %14 = arith.divf %7, %13 : vector<1x1xf32>
    %cst_8 = arith.constant 9.800000e+01 : f32
    %15 = vector.broadcast %cst_8 : f32 to vector<1x1xf32>
    %16 = arith.divf %12, %15 : vector<1x1xf32>
    %17 = arith.mulf %14, %14 : vector<1x1xf32>
    %18 = arith.subf %16, %17 : vector<1x1xf32>
    %cst_9 = arith.constant 9.99999974E-6 : f32
    %19 = vector.broadcast %cst_9 : f32 to vector<1x1xf32>
    %20 = arith.addf %18, %19 : vector<1x1xf32>
    %21 = math.rsqrt %20 : vector<1x1xf32>
    %c0_10 = arith.constant 0 : index
    %22 = memref.load %arg4[%c0_10] : memref<4xf32, #tpu.memory_space<smem>>
    %23 = vector.broadcast %22 : f32 to vector<1x1xf32>
    %24 = arith.mulf %23, %21 : vector<1x1xf32>
    %c0_11 = arith.constant 0 : index
    %25 = memref.load %arg5[%c0_11] : memref<4xf32, #tpu.memory_space<smem>>
    %26 = arith.mulf %14, %24 : vector<1x1xf32>
    %27 = vector.broadcast %25 : f32 to vector<1x1xf32>
    %28 = arith.subf %27, %26 : vector<1x1xf32>
    %29 = vector.broadcast %24 : vector<1x1xf32> to vector<2x128xf32>
    %30 = arith.mulf %3, %29 : vector<2x128xf32>
    %31 = vector.broadcast %28 : vector<1x1xf32> to vector<2x128xf32>
    %32 = arith.addf %30, %31 : vector<2x128xf32>
    %cst_12 = arith.constant 0.000000e+00 : f32
    %33 = vector.broadcast %cst_12 : f32 to vector<2x128xf32>
    %34 = arith.maximumf %32, %33 : vector<2x128xf32>
    %35 = vector.extract_strided_slice %2 {offsets = [0, 128], sizes = [2, 128], strides = [1, 1]} : vector<2x512xf32> to vector<2x128xf32>
    %cst_13 = arith.constant dense<0.000000e+00> : vector<2xf32>
    %36 = vector.multi_reduction <add>, %35, %cst_13 [1] : vector<2x128xf32> to vector<2xf32>
    %37 = vector.shape_cast %36 : vector<2xf32> to vector<2x1xf32>
    %cst_14 = arith.constant dense<0.000000e+00> : vector<1xf32>
    %38 = vector.multi_reduction <add>, %37, %cst_14 [0] : vector<2x1xf32> to vector<1xf32>
    %39 = vector.shape_cast %38 : vector<1xf32> to vector<1x1xf32>
    %40 = arith.mulf %35, %35 : vector<2x128xf32>
    %cst_15 = arith.constant dense<0.000000e+00> : vector<2xf32>
    %41 = vector.multi_reduction <add>, %40, %cst_15 [1] : vector<2x128xf32> to vector<2xf32>
    %42 = vector.shape_cast %41 : vector<2xf32> to vector<2x1xf32>
    %cst_16 = arith.constant dense<0.000000e+00> : vector<1xf32>
    %43 = vector.multi_reduction <add>, %42, %cst_16 [0] : vector<2x1xf32> to vector<1xf32>
    %44 = vector.shape_cast %43 : vector<1xf32> to vector<1x1xf32>
    %cst_17 = arith.constant 9.800000e+01 : f32
    %45 = vector.broadcast %cst_17 : f32 to vector<1x1xf32>
    %46 = arith.divf %39, %45 : vector<1x1xf32>
    %cst_18 = arith.constant 9.800000e+01 : f32
    %47 = vector.broadcast %cst_18 : f32 to vector<1x1xf32>
    %48 = arith.divf %44, %47 : vector<1x1xf32>
    %49 = arith.mulf %46, %46 : vector<1x1xf32>
    %50 = arith.subf %48, %49 : vector<1x1xf32>
    %cst_19 = arith.constant 9.99999974E-6 : f32
    %51 = vector.broadcast %cst_19 : f32 to vector<1x1xf32>
    %52 = arith.addf %50, %51 : vector<1x1xf32>
    %53 = math.rsqrt %52 : vector<1x1xf32>
    %c1 = arith.constant 1 : index
    %54 = memref.load %arg4[%c1] : memref<4xf32, #tpu.memory_space<smem>>
    %55 = vector.broadcast %54 : f32 to vector<1x1xf32>
    %56 = arith.mulf %55, %53 : vector<1x1xf32>
    %c1_20 = arith.constant 1 : index
    %57 = memref.load %arg5[%c1_20] : memref<4xf32, #tpu.memory_space<smem>>
    %58 = arith.mulf %46, %56 : vector<1x1xf32>
    %59 = vector.broadcast %57 : f32 to vector<1x1xf32>
    %60 = arith.subf %59, %58 : vector<1x1xf32>
    %61 = vector.broadcast %56 : vector<1x1xf32> to vector<2x128xf32>
    %62 = arith.mulf %35, %61 : vector<2x128xf32>
    %63 = vector.broadcast %60 : vector<1x1xf32> to vector<2x128xf32>
    %64 = arith.addf %62, %63 : vector<2x128xf32>
    %cst_21 = arith.constant 0.000000e+00 : f32
    %65 = vector.broadcast %cst_21 : f32 to vector<2x128xf32>
    %66 = arith.maximumf %64, %65 : vector<2x128xf32>
    %67 = vector.extract_strided_slice %2 {offsets = [0, 256], sizes = [2, 128], strides = [1, 1]} : vector<2x512xf32> to vector<2x128xf32>
    %cst_22 = arith.constant dense<0.000000e+00> : vector<2xf32>
    %68 = vector.multi_reduction <add>, %67, %cst_22 [1] : vector<2x128xf32> to vector<2xf32>
    %69 = vector.shape_cast %68 : vector<2xf32> to vector<2x1xf32>
    %cst_23 = arith.constant dense<0.000000e+00> : vector<1xf32>
    %70 = vector.multi_reduction <add>, %69, %cst_23 [0] : vector<2x1xf32> to vector<1xf32>
    %71 = vector.shape_cast %70 : vector<1xf32> to vector<1x1xf32>
    %72 = arith.mulf %67, %67 : vector<2x128xf32>
    %cst_24 = arith.constant dense<0.000000e+00> : vector<2xf32>
    %73 = vector.multi_reduction <add>, %72, %cst_24 [1] : vector<2x128xf32> to vector<2xf32>
    %74 = vector.shape_cast %73 : vector<2xf32> to vector<2x1xf32>
    %cst_25 = arith.constant dense<0.000000e+00> : vector<1xf32>
    %75 = vector.multi_reduction <add>, %74, %cst_25 [0] : vector<2x1xf32> to vector<1xf32>
    %76 = vector.shape_cast %75 : vector<1xf32> to vector<1x1xf32>
    %cst_26 = arith.constant 9.800000e+01 : f32
    %77 = vector.broadcast %cst_26 : f32 to vector<1x1xf32>
    %78 = arith.divf %71, %77 : vector<1x1xf32>
    %cst_27 = arith.constant 9.800000e+01 : f32
    %79 = vector.broadcast %cst_27 : f32 to vector<1x1xf32>
    %80 = arith.divf %76, %79 : vector<1x1xf32>
    %81 = arith.mulf %78, %78 : vector<1x1xf32>
    %82 = arith.subf %80, %81 : vector<1x1xf32>
    %cst_28 = arith.constant 9.99999974E-6 : f32
    %83 = vector.broadcast %cst_28 : f32 to vector<1x1xf32>
    %84 = arith.addf %82, %83 : vector<1x1xf32>
    %85 = math.rsqrt %84 : vector<1x1xf32>
    %c2 = arith.constant 2 : index
    %86 = memref.load %arg4[%c2] : memref<4xf32, #tpu.memory_space<smem>>
    %87 = vector.broadcast %86 : f32 to vector<1x1xf32>
    %88 = arith.mulf %87, %85 : vector<1x1xf32>
    %c2_29 = arith.constant 2 : index
    %89 = memref.load %arg5[%c2_29] : memref<4xf32, #tpu.memory_space<smem>>
    %90 = arith.mulf %78, %88 : vector<1x1xf32>
    %91 = vector.broadcast %89 : f32 to vector<1x1xf32>
    %92 = arith.subf %91, %90 : vector<1x1xf32>
    %93 = vector.broadcast %88 : vector<1x1xf32> to vector<2x128xf32>
    %94 = arith.mulf %67, %93 : vector<2x128xf32>
    %95 = vector.broadcast %92 : vector<1x1xf32> to vector<2x128xf32>
    %96 = arith.addf %94, %95 : vector<2x128xf32>
    %cst_30 = arith.constant 0.000000e+00 : f32
    %97 = vector.broadcast %cst_30 : f32 to vector<2x128xf32>
    %98 = arith.maximumf %96, %97 : vector<2x128xf32>
    %99 = vector.extract_strided_slice %2 {offsets = [0, 384], sizes = [2, 128], strides = [1, 1]} : vector<2x512xf32> to vector<2x128xf32>
    %cst_31 = arith.constant dense<0.000000e+00> : vector<2xf32>
    %100 = vector.multi_reduction <add>, %99, %cst_31 [1] : vector<2x128xf32> to vector<2xf32>
    %101 = vector.shape_cast %100 : vector<2xf32> to vector<2x1xf32>
    %cst_32 = arith.constant dense<0.000000e+00> : vector<1xf32>
    %102 = vector.multi_reduction <add>, %101, %cst_32 [0] : vector<2x1xf32> to vector<1xf32>
    %103 = vector.shape_cast %102 : vector<1xf32> to vector<1x1xf32>
    %104 = arith.mulf %99, %99 : vector<2x128xf32>
    %cst_33 = arith.constant dense<0.000000e+00> : vector<2xf32>
    %105 = vector.multi_reduction <add>, %104, %cst_33 [1] : vector<2x128xf32> to vector<2xf32>
    %106 = vector.shape_cast %105 : vector<2xf32> to vector<2x1xf32>
    %cst_34 = arith.constant dense<0.000000e+00> : vector<1xf32>
    %107 = vector.multi_reduction <add>, %106, %cst_34 [0] : vector<2x1xf32> to vector<1xf32>
    %108 = vector.shape_cast %107 : vector<1xf32> to vector<1x1xf32>
    %cst_35 = arith.constant 9.800000e+01 : f32
    %109 = vector.broadcast %cst_35 : f32 to vector<1x1xf32>
    %110 = arith.divf %103, %109 : vector<1x1xf32>
    %cst_36 = arith.constant 9.800000e+01 : f32
    %111 = vector.broadcast %cst_36 : f32 to vector<1x1xf32>
    %112 = arith.divf %108, %111 : vector<1x1xf32>
    %113 = arith.mulf %110, %110 : vector<1x1xf32>
    %114 = arith.subf %112, %113 : vector<1x1xf32>
    %cst_37 = arith.constant 9.99999974E-6 : f32
    %115 = vector.broadcast %cst_37 : f32 to vector<1x1xf32>
    %116 = arith.addf %114, %115 : vector<1x1xf32>
    %117 = math.rsqrt %116 : vector<1x1xf32>
    %c3 = arith.constant 3 : index
    %118 = memref.load %arg4[%c3] : memref<4xf32, #tpu.memory_space<smem>>
    %119 = vector.broadcast %118 : f32 to vector<1x1xf32>
    %120 = arith.mulf %119, %117 : vector<1x1xf32>
    %c3_38 = arith.constant 3 : index
    %121 = memref.load %arg5[%c3_38] : memref<4xf32, #tpu.memory_space<smem>>
    %122 = arith.mulf %110, %120 : vector<1x1xf32>
    %123 = vector.broadcast %121 : f32 to vector<1x1xf32>
    %124 = arith.subf %123, %122 : vector<1x1xf32>
    %125 = vector.broadcast %120 : vector<1x1xf32> to vector<2x128xf32>
    %126 = arith.mulf %99, %125 : vector<2x128xf32>
    %127 = vector.broadcast %124 : vector<1x1xf32> to vector<2x128xf32>
    %128 = arith.addf %126, %127 : vector<2x128xf32>
    %cst_39 = arith.constant 0.000000e+00 : f32
    %129 = vector.broadcast %cst_39 : f32 to vector<2x128xf32>
    %130 = arith.maximumf %128, %129 : vector<2x128xf32>
    %131 = tpu.concatenate %34, %66, %98, %130 in 1 : vector<2x128xf32>, vector<2x128xf32>, vector<2x128xf32>, vector<2x128xf32> -> vector<2x512xf32>
    %132 = arith.truncf %131 : vector<2x512xf32> to vector<2x512xbf16>
    %c0_40 = arith.constant 0 : index
    %c0_41 = arith.constant 0 : index
    %133 = vector.load %arg2[%c0_40, %c0_41] : memref<512x512xbf16, #tpu.memory_space<vmem>>, vector<512x512xbf16>
    %cst_42 = arith.constant dense<0.000000e+00> : vector<2x512xf32>
    %134 = tpu.matmul %132, %133, %cst_42 {dimension_numbers = #tpu.dot_dimension_numbers<[1], [0], [0], [1], [0, 0, 1, 1], [], []>} : vector<2x512xbf16>, vector<512x512xbf16>, vector<2x512xf32> -> vector<2x512xf32>
    %135 = vector.extract_strided_slice %134 {offsets = [0, 0], sizes = [2, 256], strides = [1, 1]} : vector<2x512xf32> to vector<2x256xf32>
    %cst_43 = arith.constant dense<0.000000e+00> : vector<2xf32>
    %136 = vector.multi_reduction <add>, %135, %cst_43 [1] : vector<2x256xf32> to vector<2xf32>
    %137 = vector.shape_cast %136 : vector<2xf32> to vector<2x1xf32>
    %cst_44 = arith.constant dense<0.000000e+00> : vector<1xf32>
    %138 = vector.multi_reduction <add>, %137, %cst_44 [0] : vector<2x1xf32> to vector<1xf32>
    %139 = vector.shape_cast %138 : vector<1xf32> to vector<1x1xf32>
    %140 = arith.mulf %135, %135 : vector<2x256xf32>
    %cst_45 = arith.constant dense<0.000000e+00> : vector<2xf32>
    %141 = vector.multi_reduction <add>, %140, %cst_45 [1] : vector<2x256xf32> to vector<2xf32>
    %142 = vector.shape_cast %141 : vector<2xf32> to vector<2x1xf32>
    %cst_46 = arith.constant dense<0.000000e+00> : vector<1xf32>
    %143 = vector.multi_reduction <add>, %142, %cst_46 [0] : vector<2x1xf32> to vector<1xf32>
    %144 = vector.shape_cast %143 : vector<1xf32> to vector<1x1xf32>
    %cst_47 = arith.constant 3.920000e+02 : f32
    %145 = vector.broadcast %cst_47 : f32 to vector<1x1xf32>
    %146 = arith.divf %139, %145 : vector<1x1xf32>
    %cst_48 = arith.constant 3.920000e+02 : f32
    %147 = vector.broadcast %cst_48 : f32 to vector<1x1xf32>
    %148 = arith.divf %144, %147 : vector<1x1xf32>
    %149 = arith.mulf %146, %146 : vector<1x1xf32>
    %150 = arith.subf %148, %149 : vector<1x1xf32>
    %cst_49 = arith.constant 9.99999974E-6 : f32
    %151 = vector.broadcast %cst_49 : f32 to vector<1x1xf32>
    %152 = arith.addf %150, %151 : vector<1x1xf32>
    %153 = math.rsqrt %152 : vector<1x1xf32>
    %c0_50 = arith.constant 0 : index
    %154 = memref.load %arg6[%c0_50] : memref<2xf32, #tpu.memory_space<smem>>
    %155 = vector.broadcast %154 : f32 to vector<1x1xf32>
    %156 = arith.mulf %155, %153 : vector<1x1xf32>
    %c0_51 = arith.constant 0 : index
    %157 = memref.load %arg7[%c0_51] : memref<2xf32, #tpu.memory_space<smem>>
    %158 = arith.mulf %146, %156 : vector<1x1xf32>
    %159 = vector.broadcast %157 : f32 to vector<1x1xf32>
    %160 = arith.subf %159, %158 : vector<1x1xf32>
    %161 = vector.broadcast %156 : vector<1x1xf32> to vector<2x256xf32>
    %162 = arith.mulf %135, %161 : vector<2x256xf32>
    %163 = vector.broadcast %160 : vector<1x1xf32> to vector<2x256xf32>
    %164 = arith.addf %162, %163 : vector<2x256xf32>
    %cst_52 = arith.constant 0.000000e+00 : f32
    %165 = vector.broadcast %cst_52 : f32 to vector<2x256xf32>
    %166 = arith.maximumf %164, %165 : vector<2x256xf32>
    %167 = vector.extract_strided_slice %134 {offsets = [0, 256], sizes = [2, 256], strides = [1, 1]} : vector<2x512xf32> to vector<2x256xf32>
    %cst_53 = arith.constant dense<0.000000e+00> : vector<2xf32>
    %168 = vector.multi_reduction <add>, %167, %cst_53 [1] : vector<2x256xf32> to vector<2xf32>
    %169 = vector.shape_cast %168 : vector<2xf32> to vector<2x1xf32>
    %cst_54 = arith.constant dense<0.000000e+00> : vector<1xf32>
    %170 = vector.multi_reduction <add>, %169, %cst_54 [0] : vector<2x1xf32> to vector<1xf32>
    %171 = vector.shape_cast %170 : vector<1xf32> to vector<1x1xf32>
    %172 = arith.mulf %167, %167 : vector<2x256xf32>
    %cst_55 = arith.constant dense<0.000000e+00> : vector<2xf32>
    %173 = vector.multi_reduction <add>, %172, %cst_55 [1] : vector<2x256xf32> to vector<2xf32>
    %174 = vector.shape_cast %173 : vector<2xf32> to vector<2x1xf32>
    %cst_56 = arith.constant dense<0.000000e+00> : vector<1xf32>
    %175 = vector.multi_reduction <add>, %174, %cst_56 [0] : vector<2x1xf32> to vector<1xf32>
    %176 = vector.shape_cast %175 : vector<1xf32> to vector<1x1xf32>
    %cst_57 = arith.constant 3.920000e+02 : f32
    %177 = vector.broadcast %cst_57 : f32 to vector<1x1xf32>
    %178 = arith.divf %171, %177 : vector<1x1xf32>
    %cst_58 = arith.constant 3.920000e+02 : f32
    %179 = vector.broadcast %cst_58 : f32 to vector<1x1xf32>
    %180 = arith.divf %176, %179 : vector<1x1xf32>
    %181 = arith.mulf %178, %178 : vector<1x1xf32>
    %182 = arith.subf %180, %181 : vector<1x1xf32>
    %cst_59 = arith.constant 9.99999974E-6 : f32
    %183 = vector.broadcast %cst_59 : f32 to vector<1x1xf32>
    %184 = arith.addf %182, %183 : vector<1x1xf32>
    %185 = math.rsqrt %184 : vector<1x1xf32>
    %c1_60 = arith.constant 1 : index
    %186 = memref.load %arg6[%c1_60] : memref<2xf32, #tpu.memory_space<smem>>
    %187 = vector.broadcast %186 : f32 to vector<1x1xf32>
    %188 = arith.mulf %187, %185 : vector<1x1xf32>
    %c1_61 = arith.constant 1 : index
    %189 = memref.load %arg7[%c1_61] : memref<2xf32, #tpu.memory_space<smem>>
    %190 = arith.mulf %178, %188 : vector<1x1xf32>
    %191 = vector.broadcast %189 : f32 to vector<1x1xf32>
    %192 = arith.subf %191, %190 : vector<1x1xf32>
    %193 = vector.broadcast %188 : vector<1x1xf32> to vector<2x256xf32>
    %194 = arith.mulf %167, %193 : vector<2x256xf32>
    %195 = vector.broadcast %192 : vector<1x1xf32> to vector<2x256xf32>
    %196 = arith.addf %194, %195 : vector<2x256xf32>
    %cst_62 = arith.constant 0.000000e+00 : f32
    %197 = vector.broadcast %cst_62 : f32 to vector<2x256xf32>
    %198 = arith.maximumf %196, %197 : vector<2x256xf32>
    %199 = tpu.concatenate %166, %198 in 1 : vector<2x256xf32>, vector<2x256xf32> -> vector<2x512xf32>
    %200 = arith.truncf %199 : vector<2x512xf32> to vector<2x512xbf16>
    %c0_63 = arith.constant 0 : index
    %c0_64 = arith.constant 0 : index
    %201 = vector.load %arg3[%c0_63, %c0_64] : memref<512x784xbf16, #tpu.memory_space<vmem>>, vector<512x784xbf16>
    %cst_65 = arith.constant dense<0.000000e+00> : vector<2x784xf32>
    %202 = tpu.matmul %200, %201, %cst_65 {dimension_numbers = #tpu.dot_dimension_numbers<[1], [0], [0], [1], [0, 0, 1, 1], [], []>} : vector<2x512xbf16>, vector<512x784xbf16>, vector<2x784xf32> -> vector<2x784xf32>
    %203 = math.tanh %202 : vector<2x784xf32>
    %c0_66 = arith.constant 0 : index
    %c0_67 = arith.constant 0 : index
    %204 = vector.load %arg8[%c0_66, %c0_67] : memref<2x784xf32, #tpu.memory_space<vmem>>, vector<2x784xf32>
    tpu.vector_store %arg8[%c0_66, %c0_67], %203 {strides = array<i32>} : memref<2x784xf32, #tpu.memory_space<vmem>>, vector<2x784xf32>,
    return
  }
}

</mosaic_0001>

<llo_original>
// kernel: generator_forward.1
$region0: #{generator_forward.1}
  #allocation0 [shape = 'u32[]', space=smem, size = 0x4, offset = 0x4, fixed_abs, tag = 'smem constant byte address 0x4 - core index']
  #allocation1 [shape = 'u32[144,128]{1,0:T(1,128)}', space=vmem, size = 0x12000, scoped, tag = 'internal scratch']
  %s0 = inlined_call_operand.vmem [shape: bf16[2,32], index: 0, kind: input, shape index: {}]
  %s1 = inlined_call_operand.vmem [shape: bf16[32,512], index: 1, kind: input, shape index: {}]
  %s2 = inlined_call_operand.vmem [shape: bf16[512,512], index: 2, kind: input, shape index: {}]
  %s3 = inlined_call_operand.vmem [shape: bf16[512,784], index: 3, kind: input, shape index: {}]
  %s4 = inlined_call_operand.vmem [shape: f32[4], index: 4, kind: input, shape index: {}]
  %s5 = inlined_call_operand.vmem [shape: f32[4], index: 5, kind: input, shape index: {}]
  %s6 = inlined_call_operand.vmem [shape: f32[2], index: 6, kind: input, shape index: {}]
  %s7 = inlined_call_operand.vmem [shape: f32[2], index: 7, kind: input, shape index: {}]
  %s8 = inlined_call_operand.vmem [shape: f32[2,784], index: 8, kind: output, shape index: {}]
  %s9 = sld [smem:[#allocation0]]
  $region58: #{generator_forward.1} parent=0
    _
  %s11 = ssub.s32 1, %s9
  %s12 = scalar_select 0, %s11, %s9
  $region1: #{generator_forward.1} parent=0
    #allocation2 [shape = 'u8[512]{0}', space=smem, size = 0x200, scoped, tag = 'input window, operand 4, single buffered']
    #allocation3 [shape = 's32[1]{0}', space=sflag, size = 0x4, scoped, tag = 'scoped memory for generator_forward.1']
    #allocation4 [shape = 'u8[512]{0}', space=smem, size = 0x200, scoped, tag = 'input window, operand 5, single buffered']
    #allocation5 [shape = 's32[1]{0}', space=sflag, size = 0x4, scoped, tag = 'scoped memory for generator_forward.1']
    #allocation6 [shape = 'u8[512]{0}', space=smem, size = 0x200, scoped, tag = 'input window, operand 6, single buffered']
    #allocation7 [shape = 'u8[512]{0}', space=smem, size = 0x200, scoped, tag = 'input window, operand 7, single buffered']
    #allocation8 [shape = 's32[1]{0}', space=sflag, size = 0x4, scoped, tag = 'scoped memory for generator_forward.1']
    %13 = vsyncpa [#allocation3], 0
    %14 = vsyncpa [#allocation5], 0
    %15 = vsyncpa [#allocation8], 0
    // Predicated region
    $region2: #{generator_forward.1} parent=1 // pred_check
      _
    $region3: #{generator_forward.1} parent=1 // pred_check_branch
      %17 = sbr.rel (0) target = $region5
    $region4: #{generator_forward.1} parent=1 // pred_region
      _
    $region5: #{generator_forward.1} parent=1 // pred_fallthru
      _
    // Predicated region
    $region6: #{generator_forward.1} parent=1 // pred_check
      _
    $region7: #{generator_forward.1} parent=1 // pred_check_branch
      %19 = sbr.rel (0) target = $region9
    $region8: #{generator_forward.1} parent=1 // pred_region
      _
    $region9: #{generator_forward.1} parent=1 // pred_fallthru
      _
    // Predicated region
    $region10: #{generator_forward.1} parent=1 // pred_check
      _
    $region11: #{generator_forward.1} parent=1 // pred_check_branch
      %21 = sbr.rel (0) target = $region13
    $region12: #{generator_forward.1} parent=1 // pred_region
      _
    $region13: #{generator_forward.1} parent=1 // pred_fallthru
      _
    // Predicated region
    $region14: #{generator_forward.1} parent=1 // pred_check
      _
    $region15: #{generator_forward.1} parent=1 // pred_check_branch
      %23 = sbr.rel (0) target = $region17
    $region16: #{generator_forward.1} parent=1 // pred_region
      _
    $region17: #{generator_forward.1} parent=1 // pred_fallthru
      _
    // Predicated region
    $region18: #{generator_forward.1} parent=1 // pred_check
      _
    $region19: #{generator_forward.1} parent=1 // pred_check_branch
      %25 = sbr.rel (0) target = $region21
    $region20: #{generator_forward.1} parent=1 // pred_region
      %s27 = ssub.s32 16, 16
      %28 = vsyncadd [#allocation3], %s27
      %s30 = sshll.u32 %s4, 4
      %s31 = int_to_ptr.vmem [resolvable:$true] %s30
      %33 = dma.vmem_to_smem %s31, 16, [#allocation2], [#allocation3]
    $region21: #{generator_forward.1} parent=1 // pred_fallthru
      _
    // Predicated region
    $region22: #{generator_forward.1} parent=1 // pred_check
      _
    $region23: #{generator_forward.1} parent=1 // pred_check_branch
      %35 = sbr.rel (0) target = $region25
    $region24: #{generator_forward.1} parent=1 // pred_region
      %s37 = ssub.s32 16, 16
      %38 = vsyncadd [#allocation5], %s37
      %s40 = sshll.u32 %s5, 4
      %s41 = int_to_ptr.vmem [resolvable:$true] %s40
      %43 = dma.vmem_to_smem %s41, 16, [#allocation4], [#allocation5]
    $region25: #{generator_forward.1} parent=1 // pred_fallthru
      _
    // Predicated region
    $region26: #{generator_forward.1} parent=1 // pred_check
      _
    $region27: #{generator_forward.1} parent=1 // pred_check_branch
      %45 = sbr.rel (0) target = $region29
    $region28: #{generator_forward.1} parent=1 // pred_region
      %s47 = ssub.s32 16, 16
      %48 = vsyncadd [#allocation5], %s47
      %s50 = sshll.u32 %s6, 4
      %s51 = int_to_ptr.vmem [resolvable:$true] %s50
      %53 = dma.vmem_to_smem %s51, 16, [#allocation6], [#allocation5]
    $region29: #{generator_forward.1} parent=1 // pred_fallthru
      _
    // Predicated region
    $region30: #{generator_forward.1} parent=1 // pred_check
      _
    $region31: #{generator_forward.1} parent=1 // pred_check_branch
      %55 = sbr.rel (0) target = $region33
    $region32: #{generator_forward.1} parent=1 // pred_region
      %s57 = ssub.s32 16, 16
      %58 = vsyncadd [#allocation8], %s57
      %s60 = sshll.u32 %s7, 4
      %s61 = int_to_ptr.vmem [resolvable:$true] %s60
      %63 = dma.vmem_to_smem %s61, 16, [#allocation7], [#allocation8]
    $region33: #{generator_forward.1} parent=1 // pred_fallthru
      _
    // Predicated region
    $region34: #{generator_forward.1} parent=1 // pred_check
      _
    $region35: #{generator_forward.1} parent=1 // pred_check_branch
      %65 = sbr.rel (0) target = $region37
    $region36: #{generator_forward.1} parent=1 // pred_region
      %66 = dma.done [#allocation3], 16
    $region37: #{generator_forward.1} parent=1 // pred_fallthru
      _
    // Predicated region
    $region38: #{generator_forward.1} parent=1 // pred_check
      _
    $region39: #{generator_forward.1} parent=1 // pred_check_branch
      %68 = sbr.rel (0) target = $region41
    $region40: #{generator_forward.1} parent=1 // pred_region
      %69 = dma.done [#allocation5], 16
    $region41: #{generator_forward.1} parent=1 // pred_fallthru
      _
    // Predicated region
    $region42: #{generator_forward.1} parent=1 // pred_check
      _
    $region43: #{generator_forward.1} parent=1 // pred_check_branch
      %71 = sbr.rel (0) target = $region45
    $region44: #{generator_forward.1} parent=1 // pred_region
      %72 = dma.done [#allocation5], 16
    $region45: #{generator_forward.1} parent=1 // pred_fallthru
      _
    // Predicated region
    $region46: #{generator_forward.1} parent=1 // pred_check
      _
    $region47: #{generator_forward.1} parent=1 // pred_check_branch
      %74 = sbr.rel (0) target = $region49
    $region48: #{generator_forward.1} parent=1 // pred_region
      %75 = dma.done [#allocation8], 16
    $region49: #{generator_forward.1} parent=1 // pred_fallthru
      _
    %76 = sfence
    %v78 = vld [vmem:[%s0] sm:$0x1]
    %v79 = vld [vmem:[%s1] sm:$0xff]
    %v80 = vld [vmem:[%s1 + $0x8] sm:$0xff]
    %v81 = vld [vmem:[%s1 + $0x10] sm:$0xff]
    %v82 = vld [vmem:[%s1 + $0x18] sm:$0xff]
    %v83 = vld [vmem:[%s1 + $0x20] sm:$0xff]
    %v84 = vld [vmem:[%s1 + $0x28] sm:$0xff]
    %v85 = vld [vmem:[%s1 + $0x30] sm:$0xff]
    %v86 = vld [vmem:[%s1 + $0x38] sm:$0xff]
    %v95 = vunpack.c.l.b16 %v79
    %v96 = vunpack.c.h.b16 %v79
    %v97 = vunpack.c.l.b16 %v80
    %v98 = vunpack.c.h.b16 %v80
    %v99 = vunpack.c.l.b16 %v81
    %v100 = vunpack.c.h.b16 %v81
    %v101 = vunpack.c.l.b16 %v82
    %v102 = vunpack.c.h.b16 %v82
    %v103 = vunpack.c.l.b16 %v83
    %v104 = vunpack.c.h.b16 %v83
    %v105 = vunpack.c.l.b16 %v84
    %v106 = vunpack.c.h.b16 %v84
    %v107 = vunpack.c.l.b16 %v85
    %v108 = vunpack.c.h.b16 %v85
    %v109 = vunpack.c.l.b16 %v86
    %v110 = vunpack.c.h.b16 %v86
    %v111 = vpack.c.b16 %v99, %v95
    %v112 = vpack.c.b16 %v100, %v96
    %v113 = vpack.c.b16 %v101, %v97
    %v114 = vpack.c.b16 %v102, %v98
    %v115 = vpack.c.b16 %v107, %v103
    %v116 = vpack.c.b16 %v108, %v104
    %v117 = vpack.c.b16 %v109, %v105
    %v118 = vpack.c.b16 %v110, %v106
    %vm127 = vcmask 261120
    %v129 = vsel %vm127, %v78, 0
    %131 = vmatprep.subr.bf16.mxu0 0
    %132 = vmatpush1.bf16.msra.mxu0 0
    %133 = vmatprep.subr.bf16.mxu0 0
    %134 = vmatpush1.bf16.msra.mxu0 0
    %135 = vmatprep.subr.bf16.mxu0 0
    %136 = vmatpush1.bf16.msra.mxu0 0
    %137 = vmatprep.subr.bf16.mxu0 0
    %138 = vmatpush1.bf16.msra.mxu0 0
    %139 = vmatprep.subr.bf16.mxu0 0
    %140 = vmatpush1.bf16.msra.mxu0 0
    %141 = vmatprep.subr.bf16.mxu0 0
    %142 = vmatpush1.bf16.msra.mxu0 0
    %143 = vmatprep.subr.bf16.mxu0 %v116
    %144 = vmatpush1.bf16.msra.mxu0 %v115
    %145 = vmatprep.subr.bf16.mxu0 %v112
    %146 = vmatpush1.bf16.msra.mxu0 %v111
    %147 = vmatprep.subr.bf16.mxu0 0
    %148 = vmatpush2.bf16.msra.mxu0 0
    %149 = vmatprep.subr.bf16.mxu0 0
    %150 = vmatpush2.bf16.msra.mxu0 0
    %151 = vmatprep.subr.bf16.mxu0 0
    %152 = vmatpush2.bf16.msra.mxu0 0
    %153 = vmatprep.subr.bf16.mxu0 0
    %154 = vmatpush2.bf16.msra.mxu0 0
    %155 = vmatprep.subr.bf16.mxu0 0
    %156 = vmatpush2.bf16.msra.mxu0 0
    %157 = vmatprep.subr.bf16.mxu0 0
    %158 = vmatpush2.bf16.msra.mxu0 0
    %159 = vmatprep.subr.bf16.mxu0 0
    %160 = vmatpush2.bf16.msra.mxu0 0
    %161 = vmatprep.subr.bf16.mxu0 0
    %162 = vmatpush2.bf16.msra.mxu0 0
    %163 = vmatprep.mubr.bf16.mxu0 0
    %164 = vmatmul.mubr.bf16.gmra.mxu0 %v129
    %v165 = vpop.f32.mrf.mxu0
    %v166 = vadd.f32 0.0, %v165
    %v167 = vpop.f32.mrf.mxu0
    %v168 = vadd.f32 0.0, %v167
    %v169 = vpop.f32.mrf.mxu0
    %v170 = vpop.f32.mrf.mxu0
    %171 = vdwg.mxu0
    %172 = vmatprep.subr.bf16.mxu0 0
    %173 = vmatpush1.bf16.msra.mxu0 0
    %174 = vmatprep.subr.bf16.mxu0 0
    %175 = vmatpush1.bf16.msra.mxu0 0
    %176 = vmatprep.subr.bf16.mxu0 0
    %177 = vmatpush1.bf16.msra.mxu0 0
    %178 = vmatprep.subr.bf16.mxu0 0
    %179 = vmatpush1.bf16.msra.mxu0 0
    %180 = vmatprep.subr.bf16.mxu0 0
    %181 = vmatpush1.bf16.msra.mxu0 0
    %182 = vmatprep.subr.bf16.mxu0 0
    %183 = vmatpush1.bf16.msra.mxu0 0
    %184 = vmatprep.subr.bf16.mxu0 %v118
    %185 = vmatpush1.bf16.msra.mxu0 %v117
    %186 = vmatprep.subr.bf16.mxu0 %v114
    %187 = vmatpush1.bf16.msra.mxu0 %v113
    %188 = vmatprep.subr.bf16.mxu0 0
    %189 = vmatpush2.bf16.msra.mxu0 0
    %190 = vmatprep.subr.bf16.mxu0 0
    %191 = vmatpush2.bf16.msra.mxu0 0
    %192 = vmatprep.subr.bf16.mxu0 0
    %193 = vmatpush2.bf16.msra.mxu0 0
    %194 = vmatprep.subr.bf16.mxu0 0
    %195 = vmatpush2.bf16.msra.mxu0 0
    %196 = vmatprep.subr.bf16.mxu0 0
    %197 = vmatpush2.bf16.msra.mxu0 0
    %198 = vmatprep.subr.bf16.mxu0 0
    %199 = vmatpush2.bf16.msra.mxu0 0
    %200 = vmatprep.subr.bf16.mxu0 0
    %201 = vmatpush2.bf16.msra.mxu0 0
    %202 = vmatprep.subr.bf16.mxu0 0
    %203 = vmatpush2.bf16.msra.mxu0 0
    %204 = vmatprep.mubr.bf16.mxu0 0
    %205 = vmatmul.mubr.bf16.gmra.mxu0 %v129
    %v206 = vpop.f32.mrf.mxu0
    %v207 = vadd.f32 0.0, %v206
    %v208 = vpop.f32.mrf.mxu0
    %v209 = vadd.f32 0.0, %v208
    %v210 = vpop.f32.mrf.mxu0
    %v211 = vpop.f32.mrf.mxu0
    %212 = vdwg.mxu0
    %vm213 = vcmask 1041408
    %v214 = vsel %vm213, %v166, 0.0
    %215 = vadd.xlane.f32.xlu0 %v214
    %v216 = vpop.xlane.xlu0 %215
    %v217 = vsel %vm213, %v216, 0.0
    %v218 = vrot.slane %v217, 4
    %v219 = vadd.f32 %v217, %v218
    %v220 = vrot.slane %v219, 2
    %v221 = vadd.f32 %v219, %v220
    %v222 = vrot.slane %v221, 1
    %v223 = vadd.f32 %v221, %v222
    %v224 = vmul.f32 %v166, %v166
    %v225 = vsel %vm213, %v224, 0.0
    %226 = vadd.xlane.f32.xlu0 %v225
    %v227 = vpop.xlane.xlu0 %226
    %v228 = vsel %vm213, %v227, 0.0
    %v229 = vrot.slane %v228, 4
    %v230 = vadd.f32 %v228, %v229
    %v231 = vrot.slane %v230, 2
    %v232 = vadd.f32 %v230, %v231
    %v233 = vrot.slane %v232, 1
    %v234 = vadd.f32 %v232, %v233
    %v235 = vrcp.pop 98.0
    %v236 = vmul.f32 %v223, %v235
    %v237 = vmul.f32 %v234, %v235
    %v238 = vmul.f32 %v236, %v236
    %v239 = vsub.f32 %v237, %v238
    %v240 = vadd.f32 %v239, 1e-05
    %v241 = vrsqrt.pop %v240
    %s242 = sld [smem:[#allocation2]]
    %v243 = vstv %s242
    %v244 = vmul.f32 %v243, %v241
    %s245 = sld [smem:[#allocation4]]
    %v246 = vmul.f32 %v236, %v244
    %v247 = vstv %s245
    %v248 = vsub.f32 %v247, %v246
    %v249 = vmul.f32 %v166, %v244
    %v250 = vadd.f32 %v249, %v248
    %v251 = vmax.f32 %v250, 0.0
    %v252 = vsel %vm213, %v168, 0.0
    %253 = vadd.xlane.f32.xlu0 %v252
    %v254 = vpop.xlane.xlu0 %253
    %v255 = vsel %vm213, %v254, 0.0
    %v256 = vrot.slane %v255, 4
    %v257 = vadd.f32 %v255, %v256
    %v258 = vrot.slane %v257, 2
    %v259 = vadd.f32 %v257, %v258
    %v260 = vrot.slane %v259, 1
    %v261 = vadd.f32 %v259, %v260
    %v262 = vmul.f32 %v168, %v168
    %v263 = vsel %vm213, %v262, 0.0
    %264 = vadd.xlane.f32.xlu0 %v263
    %v265 = vpop.xlane.xlu0 %264
    %v266 = vsel %vm213, %v265, 0.0
    %v267 = vrot.slane %v266, 4
    %v268 = vadd.f32 %v266, %v267
    %v269 = vrot.slane %v268, 2
    %v270 = vadd.f32 %v268, %v269
    %v271 = vrot.slane %v270, 1
    %v272 = vadd.f32 %v270, %v271
    %v273 = vmul.f32 %v261, %v235
    %v274 = vmul.f32 %v272, %v235
    %v275 = vmul.f32 %v273, %v273
    %v276 = vsub.f32 %v274, %v275
    %v277 = vadd.f32 %v276, 1e-05
    %v278 = vrsqrt.pop %v277
    %s279 = sld [smem:[#allocation2 + $0x1]]
    %v280 = vstv %s279
    %v281 = vmul.f32 %v280, %v278
    %s282 = sld [smem:[#allocation4 + $0x1]]
    %v283 = vmul.f32 %v273, %v281
    %v284 = vstv %s282
    %v285 = vsub.f32 %v284, %v283
    %v286 = vmul.f32 %v168, %v281
    %v287 = vadd.f32 %v286, %v285
    %v288 = vmax.f32 %v287, 0.0
    %v289 = vsel %vm213, %v207, 0.0
    %290 = vadd.xlane.f32.xlu0 %v289
    %v291 = vpop.xlane.xlu0 %290
    %v292 = vsel %vm213, %v291, 0.0
    %v293 = vrot.slane %v292, 4
    %v294 = vadd.f32 %v292, %v293
    %v295 = vrot.slane %v294, 2
    %v296 = vadd.f32 %v294, %v295
    %v297 = vrot.slane %v296, 1
    %v298 = vadd.f32 %v296, %v297
    %v299 = vmul.f32 %v207, %v207
    %v300 = vsel %vm213, %v299, 0.0
    %301 = vadd.xlane.f32.xlu0 %v300
    %v302 = vpop.xlane.xlu0 %301
    %v303 = vsel %vm213, %v302, 0.0
    %v304 = vrot.slane %v303, 4
    %v305 = vadd.f32 %v303, %v304
    %v306 = vrot.slane %v305, 2
    %v307 = vadd.f32 %v305, %v306
    %v308 = vrot.slane %v307, 1
    %v309 = vadd.f32 %v307, %v308
    %v310 = vmul.f32 %v298, %v235
    %v311 = vmul.f32 %v309, %v235
    %v312 = vmul.f32 %v310, %v310
    %v313 = vsub.f32 %v311, %v312
    %v314 = vadd.f32 %v313, 1e-05
    %v315 = vrsqrt.pop %v314
    %s316 = sld [smem:[#allocation2 + $0x2]]
    %v317 = vstv %s316
    %v318 = vmul.f32 %v317, %v315
    %s319 = sld [smem:[#allocation4 + $0x2]]
    %v320 = vmul.f32 %v310, %v318
    %v321 = vstv %s319
    %v322 = vsub.f32 %v321, %v320
    %v323 = vmul.f32 %v207, %v318
    %v324 = vadd.f32 %v323, %v322
    %v325 = vmax.f32 %v324, 0.0
    %v326 = vsel %vm213, %v209, 0.0
    %327 = vadd.xlane.f32.xlu0 %v326
    %v328 = vpop.xlane.xlu0 %327
    %v329 = vsel %vm213, %v328, 0.0
    %v330 = vrot.slane %v329, 4
    %v331 = vadd.f32 %v329, %v330
    %v332 = vrot.slane %v331, 2
    %v333 = vadd.f32 %v331, %v332
    %v334 = vrot.slane %v333, 1
    %v335 = vadd.f32 %v333, %v334
    %v336 = vmul.f32 %v209, %v209
    %v337 = vsel %vm213, %v336, 0.0
    %338 = vadd.xlane.f32.xlu0 %v337
    %v339 = vpop.xlane.xlu0 %338
    %v340 = vsel %vm213, %v339, 0.0
    %v341 = vrot.slane %v340, 4
    %v342 = vadd.f32 %v340, %v341
    %v343 = vrot.slane %v342, 2
    %v344 = vadd.f32 %v342, %v343
    %v345 = vrot.slane %v344, 1
    %v346 = vadd.f32 %v344, %v345
    %v347 = vmul.f32 %v335, %v235
    %v348 = vmul.f32 %v346, %v235
    %v349 = vmul.f32 %v347, %v347
    %v350 = vsub.f32 %v348, %v349
    %v351 = vadd.f32 %v350, 1e-05
    %v352 = vrsqrt.pop %v351
    %s353 = sld [smem:[#allocation2 + $0x3]]
    %v354 = vstv %s353
    %v355 = vmul.f32 %v354, %v352
    %s356 = sld [smem:[#allocation4 + $0x3]]
    %v357 = vmul.f32 %v347, %v355
    %v358 = vstv %s356
    %v359 = vsub.f32 %v358, %v357
    %v360 = vmul.f32 %v209, %v355
    %v361 = vadd.f32 %v360, %v359
    %v362 = vmax.f32 %v361, 0.0
    %v363 = vpack.c.bf16 %v251, %v251
    %v364 = vpack.c.bf16 %v288, %v288
    %v365 = vpack.c.bf16 %v325, %v325
    %v366 = vpack.c.bf16 %v362, %v362
    %v367 = vld [vmem:[%s2] sm:$0xff]
    %v368 = vld [vmem:[%s2 + $0x8] sm:$0xff]
    %v369 = vld [vmem:[%s2 + $0x10] sm:$0xff]
    %v370 = vld [vmem:[%s2 + $0x18] sm:$0xff]
    %v371 = vld [vmem:[%s2 + $0x20] sm:$0xff]
    %v372 = vld [vmem:[%s2 + $0x28] sm:$0xff]
    %v373 = vld [vmem:[%s2 + $0x30] sm:$0xff]
    %v374 = vld [vmem:[%s2 + $0x38] sm:$0xff]
    %v375 = vld [vmem:[%s2 + $0x40] sm:$0xff]
    %v376 = vld [vmem:[%s2 + $0x48] sm:$0xff]
    %v377 = vld [vmem:[%s2 + $0x50] sm:$0xff]
    %v378 = vld [vmem:[%s2 + $0x58] sm:$0xff]
    %v379 = vld [vmem:[%s2 + $0x60] sm:$0xff]
    %v380 = vld [vmem:[%s2 + $0x68] sm:$0xff]
    %v381 = vld [vmem:[%s2 + $0x70] sm:$0xff]
    %v382 = vld [vmem:[%s2 + $0x78] sm:$0xff]
    %v383 = vld [vmem:[%s2 + $0x80] sm:$0xff]
    %v384 = vld [vmem:[%s2 + $0x88] sm:$0xff]
    %v385 = vld [vmem:[%s2 + $0x90] sm:$0xff]
    %v386 = vld [vmem:[%s2 + $0x98] sm:$0xff]
    %v387 = vld [vmem:[%s2 + $0xa0] sm:$0xff]
    %v388 = vld [vmem:[%s2 + $0xa8] sm:$0xff]
    %v389 = vld [vmem:[%s2 + $0xb0] sm:$0xff]
    %v390 = vld [vmem:[%s2 + $0xb8] sm:$0xff]
    %v391 = vld [vmem:[%s2 + $0xc0] sm:$0xff]
    %v392 = vld [vmem:[%s2 + $0xc8] sm:$0xff]
    %v393 = vld [vmem:[%s2 + $0xd0] sm:$0xff]
    %v394 = vld [vmem:[%s2 + $0xd8] sm:$0xff]
    %v395 = vld [vmem:[%s2 + $0xe0] sm:$0xff]
    %v396 = vld [vmem:[%s2 + $0xe8] sm:$0xff]
    %v397 = vld [vmem:[%s2 + $0xf0] sm:$0xff]
    %v398 = vld [vmem:[%s2 + $0xf8] sm:$0xff]
    %v399 = vld [vmem:[%s2 + $0x100] sm:$0xff]
    %v400 = vld [vmem:[%s2 + $0x108] sm:$0xff]
    %v401 = vld [vmem:[%s2 + $0x110] sm:$0xff]
    %v402 = vld [vmem:[%s2 + $0x118] sm:$0xff]
    %v403 = vld [vmem:[%s2 + $0x120] sm:$0xff]
    %v404 = vld [vmem:[%s2 + $0x128] sm:$0xff]
    %v405 = vld [vmem:[%s2 + $0x130] sm:$0xff]
    %v406 = vld [vmem:[%s2 + $0x138] sm:$0xff]
    %v407 = vld [vmem:[%s2 + $0x140] sm:$0xff]
    %v408 = vld [vmem:[%s2 + $0x148] sm:$0xff]
    %v409 = vld [vmem:[%s2 + $0x150] sm:$0xff]
    %v410 = vld [vmem:[%s2 + $0x158] sm:$0xff]
    %v411 = vld [vmem:[%s2 + $0x160] sm:$0xff]
    %v412 = vld [vmem:[%s2 + $0x168] sm:$0xff]
    %v413 = vld [vmem:[%s2 + $0x170] sm:$0xff]
    %v414 = vld [vmem:[%s2 + $0x178] sm:$0xff]
    %v415 = vld [vmem:[%s2 + $0x180] sm:$0xff]
    %v416 = vld [vmem:[%s2 + $0x188] sm:$0xff]
    %v417 = vld [vmem:[%s2 + $0x190] sm:$0xff]
    %v418 = vld [vmem:[%s2 + $0x198] sm:$0xff]
    %v419 = vld [vmem:[%s2 + $0x1a0] sm:$0xff]
    %v420 = vld [vmem:[%s2 + $0x1a8] sm:$0xff]
    %v421 = vld [vmem:[%s2 + $0x1b0] sm:$0xff]
    %v422 = vld [vmem:[%s2 + $0x1b8] sm:$0xff]
    %v423 = vld [vmem:[%s2 + $0x1c0] sm:$0xff]
    %v424 = vld [vmem:[%s2 + $0x1c8] sm:$0xff]
    %v425 = vld [vmem:[%s2 + $0x1d0] sm:$0xff]
    %v426 = vld [vmem:[%s2 + $0x1d8] sm:$0xff]
    %v427 = vld [vmem:[%s2 + $0x1e0] sm:$0xff]
    %v428 = vld [vmem:[%s2 + $0x1e8] sm:$0xff]
    %v429 = vld [vmem:[%s2 + $0x1f0] sm:$0xff]
    %v430 = vld [vmem:[%s2 + $0x1f8] sm:$0xff]
    %v431 = vld [vmem:[%s2 + $0x200] sm:$0xff]
    %v432 = vld [vmem:[%s2 + $0x208] sm:$0xff]
    %v433 = vld [vmem:[%s2 + $0x210] sm:$0xff]
    %v434 = vld [vmem:[%s2 + $0x218] sm:$0xff]
    %v435 = vld [vmem:[%s2 + $0x220] sm:$0xff]
    %v436 = vld [vmem:[%s2 + $0x228] sm:$0xff]
    %v437 = vld [vmem:[%s2 + $0x230] sm:$0xff]
    %v438 = vld [vmem:[%s2 + $0x238] sm:$0xff]
    %v439 = vld [vmem:[%s2 + $0x240] sm:$0xff]
    %v440 = vld [vmem:[%s2 + $0x248] sm:$0xff]
    %v441 = vld [vmem:[%s2 + $0x250] sm:$0xff]
    %v442 = vld [vmem:[%s2 + $0x258] sm:$0xff]
    %v443 = vld [vmem:[%s2 + $0x260] sm:$0xff]
    %v444 = vld [vmem:[%s2 + $0x268] sm:$0xff]
    %v445 = vld [vmem:[%s2 + $0x270] sm:$0xff]
    %v446 = vld [vmem:[%s2 + $0x278] sm:$0xff]
    %v447 = vld [vmem:[%s2 + $0x280] sm:$0xff]
    %v448 = vld [vmem:[%s2 + $0x288] sm:$0xff]
    %v449 = vld [vmem:[%s2 + $0x290] sm:$0xff]
    %v450 = vld [vmem:[%s2 + $0x298] sm:$0xff]
    %v451 = vld [vmem:[%s2 + $0x2a0] sm:$0xff]
    %v452 = vld [vmem:[%s2 + $0x2a8] sm:$0xff]
    %v453 = vld [vmem:[%s2 + $0x2b0] sm:$0xff]
    %v454 = vld [vmem:[%s2 + $0x2b8] sm:$0xff]
    %v455 = vld [vmem:[%s2 + $0x2c0] sm:$0xff]
    %v456 = vld [vmem:[%s2 + $0x2c8] sm:$0xff]
    %v457 = vld [vmem:[%s2 + $0x2d0] sm:$0xff]
    %v458 = vld [vmem:[%s2 + $0x2d8] sm:$0xff]
    %v459 = vld [vmem:[%s2 + $0x2e0] sm:$0xff]
    %v460 = vld [vmem:[%s2 + $0x2e8] sm:$0xff]
    %v461 = vld [vmem:[%s2 + $0x2f0] sm:$0xff]
    %v462 = vld [vmem:[%s2 + $0x2f8] sm:$0xff]
    %v463 = vld [vmem:[%s2 + $0x300] sm:$0xff]
    %v464 = vld [vmem:[%s2 + $0x308] sm:$0xff]
    %v465 = vld [vmem:[%s2 + $0x310] sm:$0xff]
    %v466 = vld [vmem:[%s2 + $0x318] sm:$0xff]
    %v467 = vld [vmem:[%s2 + $0x320] sm:$0xff]
    %v468 = vld [vmem:[%s2 + $0x328] sm:$0xff]
    %v469 = vld [vmem:[%s2 + $0x330] sm:$0xff]
    %v470 = vld [vmem:[%s2 + $0x338] sm:$0xff]
    %v471 = vld [vmem:[%s2 + $0x340] sm:$0xff]
    %v472 = vld [vmem:[%s2 + $0x348] sm:$0xff]
    %v473 = vld [vmem:[%s2 + $0x350] sm:$0xff]
    %v474 = vld [vmem:[%s2 + $0x358] sm:$0xff]
    %v475 = vld [vmem:[%s2 + $0x360] sm:$0xff]
    %v476 = vld [vmem:[%s2 + $0x368] sm:$0xff]
    %v477 = vld [vmem:[%s2 + $0x370] sm:$0xff]
    %v478 = vld [vmem:[%s2 + $0x378] sm:$0xff]
    %v479 = vld [vmem:[%s2 + $0x380] sm:$0xff]
    %v480 = vld [vmem:[%s2 + $0x388] sm:$0xff]
    %v481 = vld [vmem:[%s2 + $0x390] sm:$0xff]
    %v482 = vld [vmem:[%s2 + $0x398] sm:$0xff]
    %v483 = vld [vmem:[%s2 + $0x3a0] sm:$0xff]
    %v484 = vld [vmem:[%s2 + $0x3a8] sm:$0xff]
    %v485 = vld [vmem:[%s2 + $0x3b0] sm:$0xff]
    %v486 = vld [vmem:[%s2 + $0x3b8] sm:$0xff]
    %v487 = vld [vmem:[%s2 + $0x3c0] sm:$0xff]
    %v488 = vld [vmem:[%s2 + $0x3c8] sm:$0xff]
    %v489 = vld [vmem:[%s2 + $0x3d0] sm:$0xff]
    %v490 = vld [vmem:[%s2 + $0x3d8] sm:$0xff]
    %v491 = vld [vmem:[%s2 + $0x3e0] sm:$0xff]
    %v492 = vld [vmem:[%s2 + $0x3e8] sm:$0xff]
    %v493 = vld [vmem:[%s2 + $0x3f0] sm:$0xff]
    %v494 = vld [vmem:[%s2 + $0x3f8] sm:$0xff]
    %v623 = vunpack.c.l.b16 %v367
    %v624 = vunpack.c.h.b16 %v367
    %v625 = vunpack.c.l.b16 %v368
    %v626 = vunpack.c.h.b16 %v368
    %v627 = vunpack.c.l.b16 %v369
    %v628 = vunpack.c.h.b16 %v369
    %v629 = vunpack.c.l.b16 %v370
    %v630 = vunpack.c.h.b16 %v370
    %v631 = vunpack.c.l.b16 %v371
    %v632 = vunpack.c.h.b16 %v371
    %v633 = vunpack.c.l.b16 %v372
    %v634 = vunpack.c.h.b16 %v372
    %v635 = vunpack.c.l.b16 %v373
    %v636 = vunpack.c.h.b16 %v373
    %v637 = vunpack.c.l.b16 %v374
    %v638 = vunpack.c.h.b16 %v374
    %v639 = vunpack.c.l.b16 %v375
    %v640 = vunpack.c.h.b16 %v375
    %v641 = vunpack.c.l.b16 %v376
    %v642 = vunpack.c.h.b16 %v376
    %v643 = vunpack.c.l.b16 %v377
    %v644 = vunpack.c.h.b16 %v377
    %v645 = vunpack.c.l.b16 %v378
    %v646 = vunpack.c.h.b16 %v378
    %v647 = vunpack.c.l.b16 %v379
    %v648 = vunpack.c.h.b16 %v379
    %v649 = vunpack.c.l.b16 %v380
    %v650 = vunpack.c.h.b16 %v380
    %v651 = vunpack.c.l.b16 %v381
    %v652 = vunpack.c.h.b16 %v381
    %v653 = vunpack.c.l.b16 %v382
    %v654 = vunpack.c.h.b16 %v382
    %v655 = vunpack.c.l.b16 %v383
    %v656 = vunpack.c.h.b16 %v383
    %v657 = vunpack.c.l.b16 %v384
    %v658 = vunpack.c.h.b16 %v384
    %v659 = vunpack.c.l.b16 %v385
    %v660 = vunpack.c.h.b16 %v385
    %v661 = vunpack.c.l.b16 %v386
    %v662 = vunpack.c.h.b16 %v386
    %v663 = vunpack.c.l.b16 %v387
    %v664 = vunpack.c.h.b16 %v387
    %v665 = vunpack.c.l.b16 %v388
    %v666 = vunpack.c.h.b16 %v388
    %v667 = vunpack.c.l.b16 %v389
    %v668 = vunpack.c.h.b16 %v389
    %v669 = vunpack.c.l.b16 %v390
    %v670 = vunpack.c.h.b16 %v390
    %v671 = vunpack.c.l.b16 %v391
    %v672 = vunpack.c.h.b16 %v391
    %v673 = vunpack.c.l.b16 %v392
    %v674 = vunpack.c.h.b16 %v392
    %v675 = vunpack.c.l.b16 %v393
    %v676 = vunpack.c.h.b16 %v393
    %v677 = vunpack.c.l.b16 %v394
    %v678 = vunpack.c.h.b16 %v394
    %v679 = vunpack.c.l.b16 %v395
    %v680 = vunpack.c.h.b16 %v395
    %v681 = vunpack.c.l.b16 %v396
    %v682 = vunpack.c.h.b16 %v396
    %v683 = vunpack.c.l.b16 %v397
    %v684 = vunpack.c.h.b16 %v397
    %v685 = vunpack.c.l.b16 %v398
    %v686 = vunpack.c.h.b16 %v398
    %v687 = vunpack.c.l.b16 %v399
    %v688 = vunpack.c.h.b16 %v399
    %v689 = vunpack.c.l.b16 %v400
    %v690 = vunpack.c.h.b16 %v400
    %v691 = vunpack.c.l.b16 %v401
    %v692 = vunpack.c.h.b16 %v401
    %v693 = vunpack.c.l.b16 %v402
    %v694 = vunpack.c.h.b16 %v402
    %v695 = vunpack.c.l.b16 %v403
    %v696 = vunpack.c.h.b16 %v403
    %v697 = vunpack.c.l.b16 %v404
    %v698 = vunpack.c.h.b16 %v404
    %v699 = vunpack.c.l.b16 %v405
    %v700 = vunpack.c.h.b16 %v405
    %v701 = vunpack.c.l.b16 %v406
    %v702 = vunpack.c.h.b16 %v406
    %v703 = vunpack.c.l.b16 %v407
    %v704 = vunpack.c.h.b16 %v407
    %v705 = vunpack.c.l.b16 %v408
    %v706 = vunpack.c.h.b16 %v408
    %v707 = vunpack.c.l.b16 %v409
    %v708 = vunpack.c.h.b16 %v409
    %v709 = vunpack.c.l.b16 %v410
    %v710 = vunpack.c.h.b16 %v410
    %v711 = vunpack.c.l.b16 %v411
    %v712 = vunpack.c.h.b16 %v411
    %v713 = vunpack.c.l.b16 %v412
    %v714 = vunpack.c.h.b16 %v412
    %v715 = vunpack.c.l.b16 %v413
    %v716 = vunpack.c.h.b16 %v413
    %v717 = vunpack.c.l.b16 %v414
    %v718 = vunpack.c.h.b16 %v414
    %v719 = vunpack.c.l.b16 %v415
    %v720 = vunpack.c.h.b16 %v415
    %v721 = vunpack.c.l.b16 %v416
    %v722 = vunpack.c.h.b16 %v416
    %v723 = vunpack.c.l.b16 %v417
    %v724 = vunpack.c.h.b16 %v417
    %v725 = vunpack.c.l.b16 %v418
    %v726 = vunpack.c.h.b16 %v418
    %v727 = vunpack.c.l.b16 %v419
    %v728 = vunpack.c.h.b16 %v419
    %v729 = vunpack.c.l.b16 %v420
    %v730 = vunpack.c.h.b16 %v420
    %v731 = vunpack.c.l.b16 %v421
    %v732 = vunpack.c.h.b16 %v421
    %v733 = vunpack.c.l.b16 %v422
    %v734 = vunpack.c.h.b16 %v422
    %v735 = vunpack.c.l.b16 %v423
    %v736 = vunpack.c.h.b16 %v423
    %v737 = vunpack.c.l.b16 %v424
    %v738 = vunpack.c.h.b16 %v424
    %v739 = vunpack.c.l.b16 %v425
    %v740 = vunpack.c.h.b16 %v425
    %v741 = vunpack.c.l.b16 %v426
    %v742 = vunpack.c.h.b16 %v426
    %v743 = vunpack.c.l.b16 %v427
    %v744 = vunpack.c.h.b16 %v427
    %v745 = vunpack.c.l.b16 %v428
    %v746 = vunpack.c.h.b16 %v428
    %v747 = vunpack.c.l.b16 %v429
    %v748 = vunpack.c.h.b16 %v429
    %v749 = vunpack.c.l.b16 %v430
    %v750 = vunpack.c.h.b16 %v430
    %v751 = vunpack.c.l.b16 %v431
    %v752 = vunpack.c.h.b16 %v431
    %v753 = vunpack.c.l.b16 %v432
    %v754 = vunpack.c.h.b16 %v432
    %v755 = vunpack.c.l.b16 %v433
    %v756 = vunpack.c.h.b16 %v433
    %v757 = vunpack.c.l.b16 %v434
    %v758 = vunpack.c.h.b16 %v434
    %v759 = vunpack.c.l.b16 %v435
    %v760 = vunpack.c.h.b16 %v435
    %v761 = vunpack.c.l.b16 %v436
    %v762 = vunpack.c.h.b16 %v436
    %v763 = vunpack.c.l.b16 %v437
    %v764 = vunpack.c.h.b16 %v437
    %v765 = vunpack.c.l.b16 %v438
    %v766 = vunpack.c.h.b16 %v438
    %v767 = vunpack.c.l.b16 %v439
    %v768 = vunpack.c.h.b16 %v439
    %v769 = vunpack.c.l.b16 %v440
    %v770 = vunpack.c.h.b16 %v440
    %v771 = vunpack.c.l.b16 %v441
    %v772 = vunpack.c.h.b16 %v441
    %v773 = vunpack.c.l.b16 %v442
    %v774 = vunpack.c.h.b16 %v442
    %v775 = vunpack.c.l.b16 %v443
    %v776 = vunpack.c.h.b16 %v443
    %v777 = vunpack.c.l.b16 %v444
    %v778 = vunpack.c.h.b16 %v444
    %v779 = vunpack.c.l.b16 %v445
    %v780 = vunpack.c.h.b16 %v445
    %v781 = vunpack.c.l.b16 %v446
    %v782 = vunpack.c.h.b16 %v446
    %v783 = vunpack.c.l.b16 %v447
    %v784 = vunpack.c.h.b16 %v447
    %v785 = vunpack.c.l.b16 %v448
    %v786 = vunpack.c.h.b16 %v448
    %v787 = vunpack.c.l.b16 %v449
    %v788 = vunpack.c.h.b16 %v449
    %v789 = vunpack.c.l.b16 %v450
    %v790 = vunpack.c.h.b16 %v450
    %v791 = vunpack.c.l.b16 %v451
    %v792 = vunpack.c.h.b16 %v451
    %v793 = vunpack.c.l.b16 %v452
    %v794 = vunpack.c.h.b16 %v452
    %v795 = vunpack.c.l.b16 %v453
    %v796 = vunpack.c.h.b16 %v453
    %v797 = vunpack.c.l.b16 %v454
    %v798 = vunpack.c.h.b16 %v454
    %v799 = vunpack.c.l.b16 %v455
    %v800 = vunpack.c.h.b16 %v455
    %v801 = vunpack.c.l.b16 %v456
    %v802 = vunpack.c.h.b16 %v456
    %v803 = vunpack.c.l.b16 %v457
    %v804 = vunpack.c.h.b16 %v457
    %v805 = vunpack.c.l.b16 %v458
    %v806 = vunpack.c.h.b16 %v458
    %v807 = vunpack.c.l.b16 %v459
    %v808 = vunpack.c.h.b16 %v459
    %v809 = vunpack.c.l.b16 %v460
    %v810 = vunpack.c.h.b16 %v460
    %v811 = vunpack.c.l.b16 %v461
    %v812 = vunpack.c.h.b16 %v461
    %v813 = vunpack.c.l.b16 %v462
    %v814 = vunpack.c.h.b16 %v462
    %v815 = vunpack.c.l.b16 %v463
    %v816 = vunpack.c.h.b16 %v463
    %v817 = vunpack.c.l.b16 %v464
    %v818 = vunpack.c.h.b16 %v464
    %v819 = vunpack.c.l.b16 %v465
    %v820 = vunpack.c.h.b16 %v465
    %v821 = vunpack.c.l.b16 %v466
    %v822 = vunpack.c.h.b16 %v466
    %v823 = vunpack.c.l.b16 %v467
    %v824 = vunpack.c.h.b16 %v467
    %v825 = vunpack.c.l.b16 %v468
    %v826 = vunpack.c.h.b16 %v468
    %v827 = vunpack.c.l.b16 %v469
    %v828 = vunpack.c.h.b16 %v469
    %v829 = vunpack.c.l.b16 %v470
    %v830 = vunpack.c.h.b16 %v470
    %v831 = vunpack.c.l.b16 %v471
    %v832 = vunpack.c.h.b16 %v471
    %v833 = vunpack.c.l.b16 %v472
    %v834 = vunpack.c.h.b16 %v472
    %v835 = vunpack.c.l.b16 %v473
    %v836 = vunpack.c.h.b16 %v473
    %v837 = vunpack.c.l.b16 %v474
    %v838 = vunpack.c.h.b16 %v474
    %v839 = vunpack.c.l.b16 %v475
    %v840 = vunpack.c.h.b16 %v475
    %v841 = vunpack.c.l.b16 %v476
    %v842 = vunpack.c.h.b16 %v476
    %v843 = vunpack.c.l.b16 %v477
    %v844 = vunpack.c.h.b16 %v477
    %v845 = vunpack.c.l.b16 %v478
    %v846 = vunpack.c.h.b16 %v478
    %v847 = vunpack.c.l.b16 %v479
    %v848 = vunpack.c.h.b16 %v479
    %v849 = vunpack.c.l.b16 %v480
    %v850 = vunpack.c.h.b16 %v480
    %v851 = vunpack.c.l.b16 %v481
    %v852 = vunpack.c.h.b16 %v481
    %v853 = vunpack.c.l.b16 %v482
    %v854 = vunpack.c.h.b16 %v482
    %v855 = vunpack.c.l.b16 %v483
    %v856 = vunpack.c.h.b16 %v483
    %v857 = vunpack.c.l.b16 %v484
    %v858 = vunpack.c.h.b16 %v484
    %v859 = vunpack.c.l.b16 %v485
    %v860 = vunpack.c.h.b16 %v485
    %v861 = vunpack.c.l.b16 %v486
    %v862 = vunpack.c.h.b16 %v486
    %v863 = vunpack.c.l.b16 %v487
    %v864 = vunpack.c.h.b16 %v487
    %v865 = vunpack.c.l.b16 %v488
    %v866 = vunpack.c.h.b16 %v488
    %v867 = vunpack.c.l.b16 %v489
    %v868 = vunpack.c.h.b16 %v489
    %v869 = vunpack.c.l.b16 %v490
    %v870 = vunpack.c.h.b16 %v490
    %v871 = vunpack.c.l.b16 %v491
    %v872 = vunpack.c.h.b16 %v491
    %v873 = vunpack.c.l.b16 %v492
    %v874 = vunpack.c.h.b16 %v492
    %v875 = vunpack.c.l.b16 %v493
    %v876 = vunpack.c.h.b16 %v493
    %v877 = vunpack.c.l.b16 %v494
    %v878 = vunpack.c.h.b16 %v494
    %v879 = vpack.c.b16 %v627, %v623
    %v880 = vpack.c.b16 %v628, %v624
    %v881 = vpack.c.b16 %v629, %v625
    %v882 = vpack.c.b16 %v630, %v626
    %v883 = vpack.c.b16 %v635, %v631
    %v884 = vpack.c.b16 %v636, %v632
    %v885 = vpack.c.b16 %v637, %v633
    %v886 = vpack.c.b16 %v638, %v634
    %v887 = vpack.c.b16 %v643, %v639
    %v888 = vpack.c.b16 %v644, %v640
    %v889 = vpack.c.b16 %v645, %v641
    %v890 = vpack.c.b16 %v646, %v642
    %v891 = vpack.c.b16 %v651, %v647
    %v892 = vpack.c.b16 %v652, %v648
    %v893 = vpack.c.b16 %v653, %v649
    %v894 = vpack.c.b16 %v654, %v650
    %v895 = vpack.c.b16 %v659, %v655
    %v896 = vpack.c.b16 %v660, %v656
    %v897 = vpack.c.b16 %v661, %v657
    %v898 = vpack.c.b16 %v662, %v658
    %v899 = vpack.c.b16 %v667, %v663
    %v900 = vpack.c.b16 %v668, %v664
    %v901 = vpack.c.b16 %v669, %v665
    %v902 = vpack.c.b16 %v670, %v666
    %v903 = vpack.c.b16 %v675, %v671
    %v904 = vpack.c.b16 %v676, %v672
    %v905 = vpack.c.b16 %v677, %v673
    %v906 = vpack.c.b16 %v678, %v674
    %v907 = vpack.c.b16 %v683, %v679
    %v908 = vpack.c.b16 %v684, %v680
    %v909 = vpack.c.b16 %v685, %v681
    %v910 = vpack.c.b16 %v686, %v682
    %v911 = vpack.c.b16 %v691, %v687
    %v912 = vpack.c.b16 %v692, %v688
    %v913 = vpack.c.b16 %v693, %v689
    %v914 = vpack.c.b16 %v694, %v690
    %v915 = vpack.c.b16 %v699, %v695
    %v916 = vpack.c.b16 %v700, %v696
    %v917 = vpack.c.b16 %v701, %v697
    %v918 = vpack.c.b16 %v702, %v698
    %v919 = vpack.c.b16 %v707, %v703
    %v920 = vpack.c.b16 %v708, %v704
    %v921 = vpack.c.b16 %v709, %v705
    %v922 = vpack.c.b16 %v710, %v706
    %v923 = vpack.c.b16 %v715, %v711
    %v924 = vpack.c.b16 %v716, %v712
    %v925 = vpack.c.b16 %v717, %v713
    %v926 = vpack.c.b16 %v718, %v714
    %v927 = vpack.c.b16 %v723, %v719
    %v928 = vpack.c.b16 %v724, %v720
    %v929 = vpack.c.b16 %v725, %v721
    %v930 = vpack.c.b16 %v726, %v722
    %v931 = vpack.c.b16 %v731, %v727
    %v932 = vpack.c.b16 %v732, %v728
    %v933 = vpack.c.b16 %v733, %v729
    %v934 = vpack.c.b16 %v734, %v730
    %v935 = vpack.c.b16 %v739, %v735
    %v936 = vpack.c.b16 %v740, %v736
    %v937 = vpack.c.b16 %v741, %v737
    %v938 = vpack.c.b16 %v742, %v738
    %v939 = vpack.c.b16 %v747, %v743
    %v940 = vpack.c.b16 %v748, %v744
    %v941 = vpack.c.b16 %v749, %v745
    %v942 = vpack.c.b16 %v750, %v746
    %v943 = vpack.c.b16 %v755, %v751
    %v944 = vpack.c.b16 %v756, %v752
    %v945 = vpack.c.b16 %v757, %v753
    %v946 = vpack.c.b16 %v758, %v754
    %v947 = vpack.c.b16 %v763, %v759
    %v948 = vpack.c.b16 %v764, %v760
    %v949 = vpack.c.b16 %v765, %v761
    %v950 = vpack.c.b16 %v766, %v762
    %v951 = vpack.c.b16 %v771, %v767
    %v952 = vpack.c.b16 %v772, %v768
    %v953 = vpack.c.b16 %v773, %v769
    %v954 = vpack.c.b16 %v774, %v770
    %v955 = vpack.c.b16 %v779, %v775
    %v956 = vpack.c.b16 %v780, %v776
    %v957 = vpack.c.b16 %v781, %v777
    %v958 = vpack.c.b16 %v782, %v778
    %v959 = vpack.c.b16 %v787, %v783
    %v960 = vpack.c.b16 %v788, %v784
    %v961 = vpack.c.b16 %v789, %v785
    %v962 = vpack.c.b16 %v790, %v786
    %v963 = vpack.c.b16 %v795, %v791
    %v964 = vpack.c.b16 %v796, %v792
    %v965 = vpack.c.b16 %v797, %v793
    %v966 = vpack.c.b16 %v798, %v794
    %v967 = vpack.c.b16 %v803, %v799
    %v968 = vpack.c.b16 %v804, %v800
    %v969 = vpack.c.b16 %v805, %v801
    %v970 = vpack.c.b16 %v806, %v802
    %v971 = vpack.c.b16 %v811, %v807
    %v972 = vpack.c.b16 %v812, %v808
    %v973 = vpack.c.b16 %v813, %v809
    %v974 = vpack.c.b16 %v814, %v810
    %v975 = vpack.c.b16 %v819, %v815
    %v976 = vpack.c.b16 %v820, %v816
    %v977 = vpack.c.b16 %v821, %v817
    %v978 = vpack.c.b16 %v822, %v818
    %v979 = vpack.c.b16 %v827, %v823
    %v980 = vpack.c.b16 %v828, %v824
    %v981 = vpack.c.b16 %v829, %v825
    %v982 = vpack.c.b16 %v830, %v826
    %v983 = vpack.c.b16 %v835, %v831
    %v984 = vpack.c.b16 %v836, %v832
    %v985 = vpack.c.b16 %v837, %v833
    %v986 = vpack.c.b16 %v838, %v834
    %v987 = vpack.c.b16 %v843, %v839
    %v988 = vpack.c.b16 %v844, %v840
    %v989 = vpack.c.b16 %v845, %v841
    %v990 = vpack.c.b16 %v846, %v842
    %v991 = vpack.c.b16 %v851, %v847
    %v992 = vpack.c.b16 %v852, %v848
    %v993 = vpack.c.b16 %v853, %v849
    %v994 = vpack.c.b16 %v854, %v850
    %v995 = vpack.c.b16 %v859, %v855
    %v996 = vpack.c.b16 %v860, %v856
    %v997 = vpack.c.b16 %v861, %v857
    %v998 = vpack.c.b16 %v862, %v858
    %v999 = vpack.c.b16 %v867, %v863
    %v1000 = vpack.c.b16 %v868, %v864
    %v1001 = vpack.c.b16 %v869, %v865
    %v1002 = vpack.c.b16 %v870, %v866
    %v1003 = vpack.c.b16 %v875, %v871
    %v1004 = vpack.c.b16 %v876, %v872
    %v1005 = vpack.c.b16 %v877, %v873
    %v1006 = vpack.c.b16 %v878, %v874
    %1135 = vmatprep.subr.bf16.mxu0 %v908
    %1136 = vmatpush1.bf16.msra.mxu0 %v907
    %1137 = vmatprep.subr.bf16.mxu0 %v904
    %1138 = vmatpush1.bf16.msra.mxu0 %v903
    %1139 = vmatprep.subr.bf16.mxu0 %v900
    %1140 = vmatpush1.bf16.msra.mxu0 %v899
    %1141 = vmatprep.subr.bf16.mxu0 %v896
    %1142 = vmatpush1.bf16.msra.mxu0 %v895
    %1143 = vmatprep.subr.bf16.mxu0 %v892
    %1144 = vmatpush1.bf16.msra.mxu0 %v891
    %1145 = vmatprep.subr.bf16.mxu0 %v888
    %1146 = vmatpush1.bf16.msra.mxu0 %v887
    %1147 = vmatprep.subr.bf16.mxu0 %v884
    %1148 = vmatpush1.bf16.msra.mxu0 %v883
    %1149 = vmatprep.subr.bf16.mxu0 %v880
    %1150 = vmatpush1.bf16.msra.mxu0 %v879
    %1151 = vmatprep.subr.bf16.mxu0 %v940
    %1152 = vmatpush2.bf16.msra.mxu0 %v939
    %1153 = vmatprep.subr.bf16.mxu0 %v936
    %1154 = vmatpush2.bf16.msra.mxu0 %v935
    %1155 = vmatprep.subr.bf16.mxu0 %v932
    %1156 = vmatpush2.bf16.msra.mxu0 %v931
    %1157 = vmatprep.subr.bf16.mxu0 %v928
    %1158 = vmatpush2.bf16.msra.mxu0 %v927
    %1159 = vmatprep.subr.bf16.mxu0 %v924
    %1160 = vmatpush2.bf16.msra.mxu0 %v923
    %1161 = vmatprep.subr.bf16.mxu0 %v920
    %1162 = vmatpush2.bf16.msra.mxu0 %v919
    %1163 = vmatprep.subr.bf16.mxu0 %v916
    %1164 = vmatpush2.bf16.msra.mxu0 %v915
    %1165 = vmatprep.subr.bf16.mxu0 %v912
    %1166 = vmatpush2.bf16.msra.mxu0 %v911
    %1167 = vmatprep.mubr.bf16.mxu0 %v364
    %1168 = vmatmul.mubr.bf16.gmra.mxu0 %v363
    %v1169 = vpop.f32.mrf.mxu0
    %v1170 = vadd.f32 0.0, %v1169
    %v1171 = vpop.f32.mrf.mxu0
    %v1172 = vadd.f32 0.0, %v1171
    %v1173 = vpop.f32.mrf.mxu0
    %v1174 = vpop.f32.mrf.mxu0
    %1175 = vdwg.mxu0
    %1176 = vmatprep.subr.bf16.mxu0 %v972
    %1177 = vmatpush1.bf16.msra.mxu0 %v971
    %1178 = vmatprep.subr.bf16.mxu0 %v968
    %1179 = vmatpush1.bf16.msra.mxu0 %v967
    %1180 = vmatprep.subr.bf16.mxu0 %v964
    %1181 = vmatpush1.bf16.msra.mxu0 %v963
    %1182 = vmatprep.subr.bf16.mxu0 %v960
    %1183 = vmatpush1.bf16.msra.mxu0 %v959
    %1184 = vmatprep.subr.bf16.mxu0 %v956
    %1185 = vmatpush1.bf16.msra.mxu0 %v955
    %1186 = vmatprep.subr.bf16.mxu0 %v952
    %1187 = vmatpush1.bf16.msra.mxu0 %v951
    %1188 = vmatprep.subr.bf16.mxu0 %v948
    %1189 = vmatpush1.bf16.msra.mxu0 %v947
    %1190 = vmatprep.subr.bf16.mxu0 %v944
    %1191 = vmatpush1.bf16.msra.mxu0 %v943
    %1192 = vmatprep.subr.bf16.mxu0 %v1004
    %1193 = vmatpush2.bf16.msra.mxu0 %v1003
    %1194 = vmatprep.subr.bf16.mxu0 %v1000
    %1195 = vmatpush2.bf16.msra.mxu0 %v999
    %1196 = vmatprep.subr.bf16.mxu0 %v996
    %1197 = vmatpush2.bf16.msra.mxu0 %v995
    %1198 = vmatprep.subr.bf16.mxu0 %v992
    %1199 = vmatpush2.bf16.msra.mxu0 %v991
    %1200 = vmatprep.subr.bf16.mxu0 %v988
    %1201 = vmatpush2.bf16.msra.mxu0 %v987
    %1202 = vmatprep.subr.bf16.mxu0 %v984
    %1203 = vmatpush2.bf16.msra.mxu0 %v983
    %1204 = vmatprep.subr.bf16.mxu0 %v980
    %1205 = vmatpush2.bf16.msra.mxu0 %v979
    %1206 = vmatprep.subr.bf16.mxu0 %v976
    %1207 = vmatpush2.bf16.msra.mxu0 %v975
    %1208 = vmatprep.mubr.bf16.mxu0 %v366
    %1209 = vmatmul.mubr.bf16.gmra.mxu0 %v365
    %v1210 = vpop.f32.mrf.mxu0
    %v1211 = vadd.f32 %v1170, %v1210
    %v1212 = vpop.f32.mrf.mxu0
    %v1213 = vadd.f32 %v1172, %v1212
    %v1214 = vpop.f32.mrf.mxu0
    %v1215 = vpop.f32.mrf.mxu0
    %1216 = vdwg.mxu0
    %1217 = vmatprep.subr.bf16.mxu0 %v910
    %1218 = vmatpush1.bf16.msra.mxu0 %v909
    %1219 = vmatprep.subr.bf16.mxu0 %v906
    %1220 = vmatpush1.bf16.msra.mxu0 %v905
    %1221 = vmatprep.subr.bf16.mxu0 %v902
    %1222 = vmatpush1.bf16.msra.mxu0 %v901
    %1223 = vmatprep.subr.bf16.mxu0 %v898
    %1224 = vmatpush1.bf16.msra.mxu0 %v897
    %1225 = vmatprep.subr.bf16.mxu0 %v894
    %1226 = vmatpush1.bf16.msra.mxu0 %v893
    %1227 = vmatprep.subr.bf16.mxu0 %v890
    %1228 = vmatpush1.bf16.msra.mxu0 %v889
    %1229 = vmatprep.subr.bf16.mxu0 %v886
    %1230 = vmatpush1.bf16.msra.mxu0 %v885
    %1231 = vmatprep.subr.bf16.mxu0 %v882
    %1232 = vmatpush1.bf16.msra.mxu0 %v881
    %1233 = vmatprep.subr.bf16.mxu0 %v942
    %1234 = vmatpush2.bf16.msra.mxu0 %v941
    %1235 = vmatprep.subr.bf16.mxu0 %v938
    %1236 = vmatpush2.bf16.msra.mxu0 %v937
    %1237 = vmatprep.subr.bf16.mxu0 %v934
    %1238 = vmatpush2.bf16.msra.mxu0 %v933
    %1239 = vmatprep.subr.bf16.mxu0 %v930
    %1240 = vmatpush2.bf16.msra.mxu0 %v929
    %1241 = vmatprep.subr.bf16.mxu0 %v926
    %1242 = vmatpush2.bf16.msra.mxu0 %v925
    %1243 = vmatprep.subr.bf16.mxu0 %v922
    %1244 = vmatpush2.bf16.msra.mxu0 %v921
    %1245 = vmatprep.subr.bf16.mxu0 %v918
    %1246 = vmatpush2.bf16.msra.mxu0 %v917
    %1247 = vmatprep.subr.bf16.mxu0 %v914
    %1248 = vmatpush2.bf16.msra.mxu0 %v913
    %1249 = vmatprep.mubr.bf16.mxu0 %v364
    %1250 = vmatmul.mubr.bf16.gmra.mxu0 %v363
    %v1251 = vpop.f32.mrf.mxu0
    %v1252 = vadd.f32 0.0, %v1251
    %v1253 = vpop.f32.mrf.mxu0
    %v1254 = vadd.f32 0.0, %v1253
    %v1255 = vpop.f32.mrf.mxu0
    %v1256 = vpop.f32.mrf.mxu0
    %1257 = vdwg.mxu0
    %1258 = vmatprep.subr.bf16.mxu0 %v974
    %1259 = vmatpush1.bf16.msra.mxu0 %v973
    %1260 = vmatprep.subr.bf16.mxu0 %v970
    %1261 = vmatpush1.bf16.msra.mxu0 %v969
    %1262 = vmatprep.subr.bf16.mxu0 %v966
    %1263 = vmatpush1.bf16.msra.mxu0 %v965
    %1264 = vmatprep.subr.bf16.mxu0 %v962
    %1265 = vmatpush1.bf16.msra.mxu0 %v961
    %1266 = vmatprep.subr.bf16.mxu0 %v958
    %1267 = vmatpush1.bf16.msra.mxu0 %v957
    %1268 = vmatprep.subr.bf16.mxu0 %v954
    %1269 = vmatpush1.bf16.msra.mxu0 %v953
    %1270 = vmatprep.subr.bf16.mxu0 %v950
    %1271 = vmatpush1.bf16.msra.mxu0 %v949
    %1272 = vmatprep.subr.bf16.mxu0 %v946
    %1273 = vmatpush1.bf16.msra.mxu0 %v945
    %1274 = vmatprep.subr.bf16.mxu0 %v1006
    %1275 = vmatpush2.bf16.msra.mxu0 %v1005
    %1276 = vmatprep.subr.bf16.mxu0 %v1002
    %1277 = vmatpush2.bf16.msra.mxu0 %v1001
    %1278 = vmatprep.subr.bf16.mxu0 %v998
    %1279 = vmatpush2.bf16.msra.mxu0 %v997
    %1280 = vmatprep.subr.bf16.mxu0 %v994
    %1281 = vmatpush2.bf16.msra.mxu0 %v993
    %1282 = vmatprep.subr.bf16.mxu0 %v990
    %1283 = vmatpush2.bf16.msra.mxu0 %v989
    %1284 = vmatprep.subr.bf16.mxu0 %v986
    %1285 = vmatpush2.bf16.msra.mxu0 %v985
    %1286 = vmatprep.subr.bf16.mxu0 %v982
    %1287 = vmatpush2.bf16.msra.mxu0 %v981
    %1288 = vmatprep.subr.bf16.mxu0 %v978
    %1289 = vmatpush2.bf16.msra.mxu0 %v977
    %1290 = vmatprep.mubr.bf16.mxu0 %v366
    %1291 = vmatmul.mubr.bf16.gmra.mxu0 %v365
    %v1292 = vpop.f32.mrf.mxu0
    %v1293 = vadd.f32 %v1252, %v1292
    %v1294 = vpop.f32.mrf.mxu0
    %v1295 = vadd.f32 %v1254, %v1294
    %v1296 = vpop.f32.mrf.mxu0
    %v1297 = vpop.f32.mrf.mxu0
    %1298 = vdwg.mxu0
    %v1299 = vsel %vm213, %v1211, 0.0
    %v1300 = vsel %vm213, %v1213, 0.0
    %v1301 = vadd.f32 %v1299, %v1300
    %1302 = vadd.xlane.f32.xlu0 %v1301
    %v1303 = vpop.xlane.xlu0 %1302
    %v1304 = vsel %vm213, %v1303, 0.0
    %v1305 = vrot.slane %v1304, 4
    %v1306 = vadd.f32 %v1304, %v1305
    %v1307 = vrot.slane %v1306, 2
    %v1308 = vadd.f32 %v1306, %v1307
    %v1309 = vrot.slane %v1308, 1
    %v1310 = vadd.f32 %v1308, %v1309
    %v1311 = vmul.f32 %v1211, %v1211
    %v1312 = vmul.f32 %v1213, %v1213
    %v1313 = vsel %vm213, %v1311, 0.0
    %v1314 = vsel %vm213, %v1312, 0.0
    %v1315 = vadd.f32 %v1313, %v1314
    %1316 = vadd.xlane.f32.xlu0 %v1315
    %v1317 = vpop.xlane.xlu0 %1316
    %v1318 = vsel %vm213, %v1317, 0.0
    %v1319 = vrot.slane %v1318, 4
    %v1320 = vadd.f32 %v1318, %v1319
    %v1321 = vrot.slane %v1320, 2
    %v1322 = vadd.f32 %v1320, %v1321
    %v1323 = vrot.slane %v1322, 1
    %v1324 = vadd.f32 %v1322, %v1323
    %v1325 = vrcp.pop 392.0
    %v1326 = vmul.f32 %v1310, %v1325
    %v1327 = vmul.f32 %v1324, %v1325
    %v1328 = vmul.f32 %v1326, %v1326
    %v1329 = vsub.f32 %v1327, %v1328
    %v1330 = vadd.f32 %v1329, 1e-05
    %v1331 = vrsqrt.pop %v1330
    %s1332 = sld [smem:[#allocation6]]
    %v1333 = vstv %s1332
    %v1334 = vmul.f32 %v1333, %v1331
    %s1335 = sld [smem:[#allocation7]]
    %v1336 = vmul.f32 %v1326, %v1334
    %v1337 = vstv %s1335
    %v1338 = vsub.f32 %v1337, %v1336
    %v1339 = vmul.f32 %v1211, %v1334
    %v1340 = vmul.f32 %v1213, %v1334
    %v1341 = vadd.f32 %v1339, %v1338
    %v1342 = vadd.f32 %v1340, %v1338
    %v1343 = vmax.f32 %v1341, 0.0
    %v1344 = vmax.f32 %v1342, 0.0
    %v1345 = vsel %vm213, %v1293, 0.0
    %v1346 = vsel %vm213, %v1295, 0.0
    %v1347 = vadd.f32 %v1345, %v1346
    %1348 = vadd.xlane.f32.xlu0 %v1347
    %v1349 = vpop.xlane.xlu0 %1348
    %v1350 = vsel %vm213, %v1349, 0.0
    %v1351 = vrot.slane %v1350, 4
    %v1352 = vadd.f32 %v1350, %v1351
    %v1353 = vrot.slane %v1352, 2
    %v1354 = vadd.f32 %v1352, %v1353
    %v1355 = vrot.slane %v1354, 1
    %v1356 = vadd.f32 %v1354, %v1355
    %v1357 = vmul.f32 %v1293, %v1293
    %v1358 = vmul.f32 %v1295, %v1295
    %v1359 = vsel %vm213, %v1357, 0.0
    %v1360 = vsel %vm213, %v1358, 0.0
    %v1361 = vadd.f32 %v1359, %v1360
    %1362 = vadd.xlane.f32.xlu0 %v1361
    %v1363 = vpop.xlane.xlu0 %1362
    %v1364 = vsel %vm213, %v1363, 0.0
    %v1365 = vrot.slane %v1364, 4
    %v1366 = vadd.f32 %v1364, %v1365
    %v1367 = vrot.slane %v1366, 2
    %v1368 = vadd.f32 %v1366, %v1367
    %v1369 = vrot.slane %v1368, 1
    %v1370 = vadd.f32 %v1368, %v1369
    %v1371 = vmul.f32 %v1356, %v1325
    %v1372 = vmul.f32 %v1370, %v1325
    %v1373 = vmul.f32 %v1371, %v1371
    %v1374 = vsub.f32 %v1372, %v1373
    %v1375 = vadd.f32 %v1374, 1e-05
    %v1376 = vrsqrt.pop %v1375
    %s1377 = sld [smem:[#allocation6 + $0x1]]
    %v1378 = vstv %s1377
    %v1379 = vmul.f32 %v1378, %v1376
    %s1380 = sld [smem:[#allocation7 + $0x1]]
    %v1381 = vmul.f32 %v1371, %v1379
    %v1382 = vstv %s1380
    %v1383 = vsub.f32 %v1382, %v1381
    %v1384 = vmul.f32 %v1293, %v1379
    %v1385 = vmul.f32 %v1295, %v1379
    %v1386 = vadd.f32 %v1384, %v1383
    %v1387 = vadd.f32 %v1385, %v1383
    %v1388 = vmax.f32 %v1386, 0.0
    %v1389 = vmax.f32 %v1387, 0.0
    %v1390 = vpack.c.bf16 %v1343, %v1343
    %v1391 = vpack.c.bf16 %v1344, %v1344
    %v1392 = vpack.c.bf16 %v1388, %v1388
    %v1393 = vpack.c.bf16 %v1389, %v1389
    %v1394 = vld [vmem:[%s3] sm:$0xff]
    %v1395 = vld [vmem:[%s3 + $0x8] sm:$0xff]
    %v1396 = vld [vmem:[%s3 + $0x10] sm:$0xff]
    %v1397 = vld [vmem:[%s3 + $0x18] sm:$0xf]
    %v1398 = vld [vmem:[%s3 + $0x1c] sm:$0xff]
    %v1399 = vld [vmem:[%s3 + $0x24] sm:$0xff]
    %v1400 = vld [vmem:[%s3 + $0x2c] sm:$0xff]
    %v1401 = vld [vmem:[%s3 + $0x34] sm:$0xf]
    %v1402 = vld [vmem:[%s3 + $0x38] sm:$0xff]
    %v1403 = vld [vmem:[%s3 + $0x40] sm:$0xff]
    %v1404 = vld [vmem:[%s3 + $0x48] sm:$0xff]
    %v1405 = vld [vmem:[%s3 + $0x50] sm:$0xf]
    %v1406 = vld [vmem:[%s3 + $0x54] sm:$0xff]
    %v1407 = vld [vmem:[%s3 + $0x5c] sm:$0xff]
    %v1408 = vld [vmem:[%s3 + $0x64] sm:$0xff]
    %v1409 = vld [vmem:[%s3 + $0x6c] sm:$0xf]
    %v1410 = vld [vmem:[%s3 + $0x70] sm:$0xff]
    %v1411 = vld [vmem:[%s3 + $0x78] sm:$0xff]
    %v1412 = vld [vmem:[%s3 + $0x80] sm:$0xff]
    %v1413 = vld [vmem:[%s3 + $0x88] sm:$0xf]
    %v1414 = vld [vmem:[%s3 + $0x8c] sm:$0xff]
    %v1415 = vld [vmem:[%s3 + $0x94] sm:$0xff]
    %v1416 = vld [vmem:[%s3 + $0x9c] sm:$0xff]
    %v1417 = vld [vmem:[%s3 + $0xa4] sm:$0xf]
    %v1418 = vld [vmem:[%s3 + $0xa8] sm:$0xff]
    %v1419 = vld [vmem:[%s3 + $0xb0] sm:$0xff]
    %v1420 = vld [vmem:[%s3 + $0xb8] sm:$0xff]
    %v1421 = vld [vmem:[%s3 + $0xc0] sm:$0xf]
    %v1422 = vld [vmem:[%s3 + $0xc4] sm:$0xff]
    %v1423 = vld [vmem:[%s3 + $0xcc] sm:$0xff]
    %v1424 = vld [vmem:[%s3 + $0xd4] sm:$0xff]
    %v1425 = vld [vmem:[%s3 + $0xdc] sm:$0xf]
    %v1426 = vld [vmem:[%s3 + $0xe0] sm:$0xff]
    %v1427 = vld [vmem:[%s3 + $0xe8] sm:$0xff]
    %v1428 = vld [vmem:[%s3 + $0xf0] sm:$0xff]
    %v1429 = vld [vmem:[%s3 + $0xf8] sm:$0xf]
    %v1430 = vld [vmem:[%s3 + $0xfc] sm:$0xff]
    %v1431 = vld [vmem:[%s3 + $0x104] sm:$0xff]
    %v1432 = vld [vmem:[%s3 + $0x10c] sm:$0xff]
    %v1433 = vld [vmem:[%s3 + $0x114] sm:$0xf]
    %v1434 = vld [vmem:[%s3 + $0x118] sm:$0xff]
    %v1435 = vld [vmem:[%s3 + $0x120] sm:$0xff]
    %v1436 = vld [vmem:[%s3 + $0x128] sm:$0xff]
    %v1437 = vld [vmem:[%s3 + $0x130] sm:$0xf]
    %v1438 = vld [vmem:[%s3 + $0x134] sm:$0xff]
    %v1439 = vld [vmem:[%s3 + $0x13c] sm:$0xff]
    %v1440 = vld [vmem:[%s3 + $0x144] sm:$0xff]
    %v1441 = vld [vmem:[%s3 + $0x14c] sm:$0xf]
    %v1442 = vld [vmem:[%s3 + $0x150] sm:$0xff]
    %v1443 = vld [vmem:[%s3 + $0x158] sm:$0xff]
    %v1444 = vld [vmem:[%s3 + $0x160] sm:$0xff]
    %v1445 = vld [vmem:[%s3 + $0x168] sm:$0xf]
    %v1446 = vld [vmem:[%s3 + $0x16c] sm:$0xff]
    %v1447 = vld [vmem:[%s3 + $0x174] sm:$0xff]
    %v1448 = vld [vmem:[%s3 + $0x17c] sm:$0xff]
    %v1449 = vld [vmem:[%s3 + $0x184] sm:$0xf]
    %v1450 = vld [vmem:[%s3 + $0x188] sm:$0xff]
    %v1451 = vld [vmem:[%s3 + $0x190] sm:$0xff]
    %v1452 = vld [vmem:[%s3 + $0x198] sm:$0xff]
    %v1453 = vld [vmem:[%s3 + $0x1a0] sm:$0xf]
    %v1454 = vld [vmem:[%s3 + $0x1a4] sm:$0xff]
    %v1455 = vld [vmem:[%s3 + $0x1ac] sm:$0xff]
    %v1456 = vld [vmem:[%s3 + $0x1b4] sm:$0xff]
    %v1457 = vld [vmem:[%s3 + $0x1bc] sm:$0xf]
    %v1458 = vld [vmem:[%s3 + $0x1c0] sm:$0xff]
    %v1459 = vld [vmem:[%s3 + $0x1c8] sm:$0xff]
    %v1460 = vld [vmem:[%s3 + $0x1d0] sm:$0xff]
    %v1461 = vld [vmem:[%s3 + $0x1d8] sm:$0xf]
    %v1462 = vld [vmem:[%s3 + $0x1dc] sm:$0xff]
    %v1463 = vld [vmem:[%s3 + $0x1e4] sm:$0xff]
    %v1464 = vld [vmem:[%s3 + $0x1ec] sm:$0xff]
    %v1465 = vld [vmem:[%s3 + $0x1f4] sm:$0xf]
    %v1466 = vld [vmem:[%s3 + $0x1f8] sm:$0xff]
    %v1467 = vld [vmem:[%s3 + $0x200] sm:$0xff]
    %v1468 = vld [vmem:[%s3 + $0x208] sm:$0xff]
    %v1469 = vld [vmem:[%s3 + $0x210] sm:$0xf]
    %v1470 = vld [vmem:[%s3 + $0x214] sm:$0xff]
    %v1471 = vld [vmem:[%s3 + $0x21c] sm:$0xff]
    %v1472 = vld [vmem:[%s3 + $0x224] sm:$0xff]
    %v1473 = vld [vmem:[%s3 + $0x22c] sm:$0xf]
    %v1474 = vld [vmem:[%s3 + $0x230] sm:$0xff]
    %v1475 = vld [vmem:[%s3 + $0x238] sm:$0xff]
    %v1476 = vld [vmem:[%s3 + $0x240] sm:$0xff]
    %v1477 = vld [vmem:[%s3 + $0x248] sm:$0xf]
    %v1478 = vld [vmem:[%s3 + $0x24c] sm:$0xff]
    %v1479 = vld [vmem:[%s3 + $0x254] sm:$0xff]
    %v1480 = vld [vmem:[%s3 + $0x25c] sm:$0xff]
    %v1481 = vld [vmem:[%s3 + $0x264] sm:$0xf]
    %v1482 = vld [vmem:[%s3 + $0x268] sm:$0xff]
    %v1483 = vld [vmem:[%s3 + $0x270] sm:$0xff]
    %v1484 = vld [vmem:[%s3 + $0x278] sm:$0xff]
    %v1485 = vld [vmem:[%s3 + $0x280] sm:$0xf]
    %v1486 = vld [vmem:[%s3 + $0x284] sm:$0xff]
    %v1487 = vld [vmem:[%s3 + $0x28c] sm:$0xff]
    %v1488 = vld [vmem:[%s3 + $0x294] sm:$0xff]
    %v1489 = vld [vmem:[%s3 + $0x29c] sm:$0xf]
    %v1490 = vld [vmem:[%s3 + $0x2a0] sm:$0xff]
    %v1491 = vld [vmem:[%s3 + $0x2a8] sm:$0xff]
    %v1492 = vld [vmem:[%s3 + $0x2b0] sm:$0xff]
    %v1493 = vld [vmem:[%s3 + $0x2b8] sm:$0xf]
    %v1494 = vld [vmem:[%s3 + $0x2bc] sm:$0xff]
    %v1495 = vld [vmem:[%s3 + $0x2c4] sm:$0xff]
    %v1496 = vld [vmem:[%s3 + $0x2cc] sm:$0xff]
    %v1497 = vld [vmem:[%s3 + $0x2d4] sm:$0xf]
    %v1498 = vld [vmem:[%s3 + $0x2d8] sm:$0xff]
    %v1499 = vld [vmem:[%s3 + $0x2e0] sm:$0xff]
    %v1500 = vld [vmem:[%s3 + $0x2e8] sm:$0xff]
    %v1501 = vld [vmem:[%s3 + $0x2f0] sm:$0xf]
    %v1502 = vld [vmem:[%s3 + $0x2f4] sm:$0xff]
    %v1503 = vld [vmem:[%s3 + $0x2fc] sm:$0xff]
    %v1504 = vld [vmem:[%s3 + $0x304] sm:$0xff]
    %v1505 = vld [vmem:[%s3 + $0x30c] sm:$0xf]
    %v1506 = vld [vmem:[%s3 + $0x310] sm:$0xff]
    %v1507 = vld [vmem:[%s3 + $0x318] sm:$0xff]
    %v1508 = vld [vmem:[%s3 + $0x320] sm:$0xff]
    %v1509 = vld [vmem:[%s3 + $0x328] sm:$0xf]
    %v1510 = vld [vmem:[%s3 + $0x32c] sm:$0xff]
    %v1511 = vld [vmem:[%s3 + $0x334] sm:$0xff]
    %v1512 = vld [vmem:[%s3 + $0x33c] sm:$0xff]
    %v1513 = vld [vmem:[%s3 + $0x344] sm:$0xf]
    %v1514 = vld [vmem:[%s3 + $0x348] sm:$0xff]
    %v1515 = vld [vmem:[%s3 + $0x350] sm:$0xff]
    %v1516 = vld [vmem:[%s3 + $0x358] sm:$0xff]
    %v1517 = vld [vmem:[%s3 + $0x360] sm:$0xf]
    %v1518 = vld [vmem:[%s3 + $0x364] sm:$0xff]
    %v1519 = vld [vmem:[%s3 + $0x36c] sm:$0xff]
    %v1520 = vld [vmem:[%s3 + $0x374] sm:$0xff]
    %v1521 = vld [vmem:[%s3 + $0x37c] sm:$0xf]
    %v1522 = vld [vmem:[%s3 + $0x380] sm:$0xff]
    %v1523 = vld [vmem:[%s3 + $0x388] sm:$0xff]
    %v1524 = vld [vmem:[%s3 + $0x390] sm:$0xff]
    %v1525 = vld [vmem:[%s3 + $0x398] sm:$0xf]
    %v1526 = vld [vmem:[%s3 + $0x39c] sm:$0xff]
    %v1527 = vld [vmem:[%s3 + $0x3a4] sm:$0xff]
    %v1528 = vld [vmem:[%s3 + $0x3ac] sm:$0xff]
    %v1529 = vld [vmem:[%s3 + $0x3b4] sm:$0xf]
    %v1530 = vld [vmem:[%s3 + $0x3b8] sm:$0xff]
    %v1531 = vld [vmem:[%s3 + $0x3c0] sm:$0xff]
    %v1532 = vld [vmem:[%s3 + $0x3c8] sm:$0xff]
    %v1533 = vld [vmem:[%s3 + $0x3d0] sm:$0xf]
    %v1534 = vld [vmem:[%s3 + $0x3d4] sm:$0xff]
    %v1535 = vld [vmem:[%s3 + $0x3dc] sm:$0xff]
    %v1536 = vld [vmem:[%s3 + $0x3e4] sm:$0xff]
    %v1537 = vld [vmem:[%s3 + $0x3ec] sm:$0xf]
    %v1538 = vld [vmem:[%s3 + $0x3f0] sm:$0xff]
    %v1539 = vld [vmem:[%s3 + $0x3f8] sm:$0xff]
    %v1540 = vld [vmem:[%s3 + $0x400] sm:$0xff]
    %v1541 = vld [vmem:[%s3 + $0x408] sm:$0xf]
    %v1542 = vld [vmem:[%s3 + $0x40c] sm:$0xff]
    %v1543 = vld [vmem:[%s3 + $0x414] sm:$0xff]
    %v1544 = vld [vmem:[%s3 + $0x41c] sm:$0xff]
    %v1545 = vld [vmem:[%s3 + $0x424] sm:$0xf]
    %v1546 = vld [vmem:[%s3 + $0x428] sm:$0xff]
    %v1547 = vld [vmem:[%s3 + $0x430] sm:$0xff]
    %v1548 = vld [vmem:[%s3 + $0x438] sm:$0xff]
    %v1549 = vld [vmem:[%s3 + $0x440] sm:$0xf]
    %v1550 = vld [vmem:[%s3 + $0x444] sm:$0xff]
    %v1551 = vld [vmem:[%s3 + $0x44c] sm:$0xff]
    %v1552 = vld [vmem:[%s3 + $0x454] sm:$0xff]
    %v1553 = vld [vmem:[%s3 + $0x45c] sm:$0xf]
    %v1554 = vld [vmem:[%s3 + $0x460] sm:$0xff]
    %v1555 = vld [vmem:[%s3 + $0x468] sm:$0xff]
    %v1556 = vld [vmem:[%s3 + $0x470] sm:$0xff]
    %v1557 = vld [vmem:[%s3 + $0x478] sm:$0xf]
    %v1558 = vld [vmem:[%s3 + $0x47c] sm:$0xff]
    %v1559 = vld [vmem:[%s3 + $0x484] sm:$0xff]
    %v1560 = vld [vmem:[%s3 + $0x48c] sm:$0xff]
    %v1561 = vld [vmem:[%s3 + $0x494] sm:$0xf]
    %v1562 = vld [vmem:[%s3 + $0x498] sm:$0xff]
    %v1563 = vld [vmem:[%s3 + $0x4a0] sm:$0xff]
    %v1564 = vld [vmem:[%s3 + $0x4a8] sm:$0xff]
    %v1565 = vld [vmem:[%s3 + $0x4b0] sm:$0xf]
    %v1566 = vld [vmem:[%s3 + $0x4b4] sm:$0xff]
    %v1567 = vld [vmem:[%s3 + $0x4bc] sm:$0xff]
    %v1568 = vld [vmem:[%s3 + $0x4c4] sm:$0xff]
    %v1569 = vld [vmem:[%s3 + $0x4cc] sm:$0xf]
    %v1570 = vld [vmem:[%s3 + $0x4d0] sm:$0xff]
    %v1571 = vld [vmem:[%s3 + $0x4d8] sm:$0xff]
    %v1572 = vld [vmem:[%s3 + $0x4e0] sm:$0xff]
    %v1573 = vld [vmem:[%s3 + $0x4e8] sm:$0xf]
    %v1574 = vld [vmem:[%s3 + $0x4ec] sm:$0xff]
    %v1575 = vld [vmem:[%s3 + $0x4f4] sm:$0xff]
    %v1576 = vld [vmem:[%s3 + $0x4fc] sm:$0xff]
    %v1577 = vld [vmem:[%s3 + $0x504] sm:$0xf]
    %v1578 = vld [vmem:[%s3 + $0x508] sm:$0xff]
    %v1579 = vld [vmem:[%s3 + $0x510] sm:$0xff]
    %v1580 = vld [vmem:[%s3 + $0x518] sm:$0xff]
    %v1581 = vld [vmem:[%s3 + $0x520] sm:$0xf]
    %v1582 = vld [vmem:[%s3 + $0x524] sm:$0xff]
    %v1583 = vld [vmem:[%s3 + $0x52c] sm:$0xff]
    %v1584 = vld [vmem:[%s3 + $0x534] sm:$0xff]
    %v1585 = vld [vmem:[%s3 + $0x53c] sm:$0xf]
    %v1586 = vld [vmem:[%s3 + $0x540] sm:$0xff]
    %v1587 = vld [vmem:[%s3 + $0x548] sm:$0xff]
    %v1588 = vld [vmem:[%s3 + $0x550] sm:$0xff]
    %v1589 = vld [vmem:[%s3 + $0x558] sm:$0xf]
    %v1590 = vld [vmem:[%s3 + $0x55c] sm:$0xff]
    %v1591 = vld [vmem:[%s3 + $0x564] sm:$0xff]
    %v1592 = vld [vmem:[%s3 + $0x56c] sm:$0xff]
    %v1593 = vld [vmem:[%s3 + $0x574] sm:$0xf]
    %v1594 = vld [vmem:[%s3 + $0x578] sm:$0xff]
    %v1595 = vld [vmem:[%s3 + $0x580] sm:$0xff]
    %v1596 = vld [vmem:[%s3 + $0x588] sm:$0xff]
    %v1597 = vld [vmem:[%s3 + $0x590] sm:$0xf]
    %v1598 = vld [vmem:[%s3 + $0x594] sm:$0xff]
    %v1599 = vld [vmem:[%s3 + $0x59c] sm:$0xff]
    %v1600 = vld [vmem:[%s3 + $0x5a4] sm:$0xff]
    %v1601 = vld [vmem:[%s3 + $0x5ac] sm:$0xf]
    %v1602 = vld [vmem:[%s3 + $0x5b0] sm:$0xff]
    %v1603 = vld [vmem:[%s3 + $0x5b8] sm:$0xff]
    %v1604 = vld [vmem:[%s3 + $0x5c0] sm:$0xff]
    %v1605 = vld [vmem:[%s3 + $0x5c8] sm:$0xf]
    %v1606 = vld [vmem:[%s3 + $0x5cc] sm:$0xff]
    %v1607 = vld [vmem:[%s3 + $0x5d4] sm:$0xff]
    %v1608 = vld [vmem:[%s3 + $0x5dc] sm:$0xff]
    %v1609 = vld [vmem:[%s3 + $0x5e4] sm:$0xf]
    %v1610 = vld [vmem:[%s3 + $0x5e8] sm:$0xff]
    %v1611 = vld [vmem:[%s3 + $0x5f0] sm:$0xff]
    %v1612 = vld [vmem:[%s3 + $0x5f8] sm:$0xff]
    %v1613 = vld [vmem:[%s3 + $0x600] sm:$0xf]
    %v1614 = vld [vmem:[%s3 + $0x604] sm:$0xff]
    %v1615 = vld [vmem:[%s3 + $0x60c] sm:$0xff]
    %v1616 = vld [vmem:[%s3 + $0x614] sm:$0xff]
    %v1617 = vld [vmem:[%s3 + $0x61c] sm:$0xf]
    %v1618 = vld [vmem:[%s3 + $0x620] sm:$0xff]
    %v1619 = vld [vmem:[%s3 + $0x628] sm:$0xff]
    %v1620 = vld [vmem:[%s3 + $0x630] sm:$0xff]
    %v1621 = vld [vmem:[%s3 + $0x638] sm:$0xf]
    %v1622 = vld [vmem:[%s3 + $0x63c] sm:$0xff]
    %v1623 = vld [vmem:[%s3 + $0x644] sm:$0xff]
    %v1624 = vld [vmem:[%s3 + $0x64c] sm:$0xff]
    %v1625 = vld [vmem:[%s3 + $0x654] sm:$0xf]
    %v1626 = vld [vmem:[%s3 + $0x658] sm:$0xff]
    %v1627 = vld [vmem:[%s3 + $0x660] sm:$0xff]
    %v1628 = vld [vmem:[%s3 + $0x668] sm:$0xff]
    %v1629 = vld [vmem:[%s3 + $0x670] sm:$0xf]
    %v1630 = vld [vmem:[%s3 + $0x674] sm:$0xff]
    %v1631 = vld [vmem:[%s3 + $0x67c] sm:$0xff]
    %v1632 = vld [vmem:[%s3 + $0x684] sm:$0xff]
    %v1633 = vld [vmem:[%s3 + $0x68c] sm:$0xf]
    %v1634 = vld [vmem:[%s3 + $0x690] sm:$0xff]
    %v1635 = vld [vmem:[%s3 + $0x698] sm:$0xff]
    %v1636 = vld [vmem:[%s3 + $0x6a0] sm:$0xff]
    %v1637 = vld [vmem:[%s3 + $0x6a8] sm:$0xf]
    %v1638 = vld [vmem:[%s3 + $0x6ac] sm:$0xff]
    %v1639 = vld [vmem:[%s3 + $0x6b4] sm:$0xff]
    %v1640 = vld [vmem:[%s3 + $0x6bc] sm:$0xff]
    %v1641 = vld [vmem:[%s3 + $0x6c4] sm:$0xf]
    %v1642 = vld [vmem:[%s3 + $0x6c8] sm:$0xff]
    %v1643 = vld [vmem:[%s3 + $0x6d0] sm:$0xff]
    %v1644 = vld [vmem:[%s3 + $0x6d8] sm:$0xff]
    %v1645 = vld [vmem:[%s3 + $0x6e0] sm:$0xf]
    %v1646 = vld [vmem:[%s3 + $0x6e4] sm:$0xff]
    %v1647 = vld [vmem:[%s3 + $0x6ec] sm:$0xff]
    %v1648 = vld [vmem:[%s3 + $0x6f4] sm:$0xff]
    %v1649 = vld [vmem:[%s3 + $0x6fc] sm:$0xf]
    %v1906 = vunpack.c.l.b16 %v1394
    %v1907 = vunpack.c.h.b16 %v1394
    %v1908 = vunpack.c.l.b16 %v1395
    %v1909 = vunpack.c.h.b16 %v1395
    %v1910 = vunpack.c.l.b16 %v1396
    %v1911 = vunpack.c.h.b16 %v1396
    %v1912 = vunpack.c.l.b16 %v1397
    %v1913 = vunpack.c.l.b16 %v1398
    %v1914 = vunpack.c.h.b16 %v1398
    %v1915 = vunpack.c.l.b16 %v1399
    %v1916 = vunpack.c.h.b16 %v1399
    %v1917 = vunpack.c.l.b16 %v1400
    %v1918 = vunpack.c.h.b16 %v1400
    %v1919 = vunpack.c.l.b16 %v1401
    %v1920 = vunpack.c.l.b16 %v1402
    %v1921 = vunpack.c.h.b16 %v1402
    %v1922 = vunpack.c.l.b16 %v1403
    %v1923 = vunpack.c.h.b16 %v1403
    %v1924 = vunpack.c.l.b16 %v1404
    %v1925 = vunpack.c.h.b16 %v1404
    %v1926 = vunpack.c.l.b16 %v1405
    %v1927 = vunpack.c.l.b16 %v1406
    %v1928 = vunpack.c.h.b16 %v1406
    %v1929 = vunpack.c.l.b16 %v1407
    %v1930 = vunpack.c.h.b16 %v1407
    %v1931 = vunpack.c.l.b16 %v1408
    %v1932 = vunpack.c.h.b16 %v1408
    %v1933 = vunpack.c.l.b16 %v1409
    %v1934 = vunpack.c.l.b16 %v1410
    %v1935 = vunpack.c.h.b16 %v1410
    %v1936 = vunpack.c.l.b16 %v1411
    %v1937 = vunpack.c.h.b16 %v1411
    %v1938 = vunpack.c.l.b16 %v1412
    %v1939 = vunpack.c.h.b16 %v1412
    %v1940 = vunpack.c.l.b16 %v1413
    %v1941 = vunpack.c.l.b16 %v1414
    %v1942 = vunpack.c.h.b16 %v1414
    %v1943 = vunpack.c.l.b16 %v1415
    %v1944 = vunpack.c.h.b16 %v1415
    %v1945 = vunpack.c.l.b16 %v1416
    %v1946 = vunpack.c.h.b16 %v1416
    %v1947 = vunpack.c.l.b16 %v1417
    %v1948 = vunpack.c.l.b16 %v1418
    %v1949 = vunpack.c.h.b16 %v1418
    %v1950 = vunpack.c.l.b16 %v1419
    %v1951 = vunpack.c.h.b16 %v1419
    %v1952 = vunpack.c.l.b16 %v1420
    %v1953 = vunpack.c.h.b16 %v1420
    %v1954 = vunpack.c.l.b16 %v1421
    %v1955 = vunpack.c.l.b16 %v1422
    %v1956 = vunpack.c.h.b16 %v1422
    %v1957 = vunpack.c.l.b16 %v1423
    %v1958 = vunpack.c.h.b16 %v1423
    %v1959 = vunpack.c.l.b16 %v1424
    %v1960 = vunpack.c.h.b16 %v1424
    %v1961 = vunpack.c.l.b16 %v1425
    %v1962 = vunpack.c.l.b16 %v1426
    %v1963 = vunpack.c.h.b16 %v1426
    %v1964 = vunpack.c.l.b16 %v1427
    %v1965 = vunpack.c.h.b16 %v1427
    %v1966 = vunpack.c.l.b16 %v1428
    %v1967 = vunpack.c.h.b16 %v1428
    %v1968 = vunpack.c.l.b16 %v1429
    %v1969 = vunpack.c.l.b16 %v1430
    %v1970 = vunpack.c.h.b16 %v1430
    %v1971 = vunpack.c.l.b16 %v1431
    %v1972 = vunpack.c.h.b16 %v1431
    %v1973 = vunpack.c.l.b16 %v1432
    %v1974 = vunpack.c.h.b16 %v1432
    %v1975 = vunpack.c.l.b16 %v1433
    %v1976 = vunpack.c.l.b16 %v1434
    %v1977 = vunpack.c.h.b16 %v1434
    %v1978 = vunpack.c.l.b16 %v1435
    %v1979 = vunpack.c.h.b16 %v1435
    %v1980 = vunpack.c.l.b16 %v1436
    %v1981 = vunpack.c.h.b16 %v1436
    %v1982 = vunpack.c.l.b16 %v1437
    %v1983 = vunpack.c.l.b16 %v1438
    %v1984 = vunpack.c.h.b16 %v1438
    %v1985 = vunpack.c.l.b16 %v1439
    %v1986 = vunpack.c.h.b16 %v1439
    %v1987 = vunpack.c.l.b16 %v1440
    %v1988 = vunpack.c.h.b16 %v1440
    %v1989 = vunpack.c.l.b16 %v1441
    %v1990 = vunpack.c.l.b16 %v1442
    %v1991 = vunpack.c.h.b16 %v1442
    %v1992 = vunpack.c.l.b16 %v1443
    %v1993 = vunpack.c.h.b16 %v1443
    %v1994 = vunpack.c.l.b16 %v1444
    %v1995 = vunpack.c.h.b16 %v1444
    %v1996 = vunpack.c.l.b16 %v1445
    %v1997 = vunpack.c.l.b16 %v1446
    %v1998 = vunpack.c.h.b16 %v1446
    %v1999 = vunpack.c.l.b16 %v1447
    %v2000 = vunpack.c.h.b16 %v1447
    %v2001 = vunpack.c.l.b16 %v1448
    %v2002 = vunpack.c.h.b16 %v1448
    %v2003 = vunpack.c.l.b16 %v1449
    %v2004 = vunpack.c.l.b16 %v1450
    %v2005 = vunpack.c.h.b16 %v1450
    %v2006 = vunpack.c.l.b16 %v1451
    %v2007 = vunpack.c.h.b16 %v1451
    %v2008 = vunpack.c.l.b16 %v1452
    %v2009 = vunpack.c.h.b16 %v1452
    %v2010 = vunpack.c.l.b16 %v1453
    %v2011 = vunpack.c.l.b16 %v1454
    %v2012 = vunpack.c.h.b16 %v1454
    %v2013 = vunpack.c.l.b16 %v1455
    %v2014 = vunpack.c.h.b16 %v1455
    %v2015 = vunpack.c.l.b16 %v1456
    %v2016 = vunpack.c.h.b16 %v1456
    %v2017 = vunpack.c.l.b16 %v1457
    %v2018 = vunpack.c.l.b16 %v1458
    %v2019 = vunpack.c.h.b16 %v1458
    %v2020 = vunpack.c.l.b16 %v1459
    %v2021 = vunpack.c.h.b16 %v1459
    %v2022 = vunpack.c.l.b16 %v1460
    %v2023 = vunpack.c.h.b16 %v1460
    %v2024 = vunpack.c.l.b16 %v1461
    %v2025 = vunpack.c.l.b16 %v1462
    %v2026 = vunpack.c.h.b16 %v1462
    %v2027 = vunpack.c.l.b16 %v1463
    %v2028 = vunpack.c.h.b16 %v1463
    %v2029 = vunpack.c.l.b16 %v1464
    %v2030 = vunpack.c.h.b16 %v1464
    %v2031 = vunpack.c.l.b16 %v1465
    %v2032 = vunpack.c.l.b16 %v1466
    %v2033 = vunpack.c.h.b16 %v1466
    %v2034 = vunpack.c.l.b16 %v1467
    %v2035 = vunpack.c.h.b16 %v1467
    %v2036 = vunpack.c.l.b16 %v1468
    %v2037 = vunpack.c.h.b16 %v1468
    %v2038 = vunpack.c.l.b16 %v1469
    %v2039 = vunpack.c.l.b16 %v1470
    %v2040 = vunpack.c.h.b16 %v1470
    %v2041 = vunpack.c.l.b16 %v1471
    %v2042 = vunpack.c.h.b16 %v1471
    %v2043 = vunpack.c.l.b16 %v1472
    %v2044 = vunpack.c.h.b16 %v1472
    %v2045 = vunpack.c.l.b16 %v1473
    %v2046 = vunpack.c.l.b16 %v1474
    %v2047 = vunpack.c.h.b16 %v1474
    %v2048 = vunpack.c.l.b16 %v1475
    %v2049 = vunpack.c.h.b16 %v1475
    %v2050 = vunpack.c.l.b16 %v1476
    %v2051 = vunpack.c.h.b16 %v1476
    %v2052 = vunpack.c.l.b16 %v1477
    %v2053 = vunpack.c.l.b16 %v1478
    %v2054 = vunpack.c.h.b16 %v1478
    %v2055 = vunpack.c.l.b16 %v1479
    %v2056 = vunpack.c.h.b16 %v1479
    %v2057 = vunpack.c.l.b16 %v1480
    %v2058 = vunpack.c.h.b16 %v1480
    %v2059 = vunpack.c.l.b16 %v1481
    %v2060 = vunpack.c.l.b16 %v1482
    %v2061 = vunpack.c.h.b16 %v1482
    %v2062 = vunpack.c.l.b16 %v1483
    %v2063 = vunpack.c.h.b16 %v1483
    %v2064 = vunpack.c.l.b16 %v1484
    %v2065 = vunpack.c.h.b16 %v1484
    %v2066 = vunpack.c.l.b16 %v1485
    %v2067 = vunpack.c.l.b16 %v1486
    %v2068 = vunpack.c.h.b16 %v1486
    %v2069 = vunpack.c.l.b16 %v1487
    %v2070 = vunpack.c.h.b16 %v1487
    %v2071 = vunpack.c.l.b16 %v1488
    %v2072 = vunpack.c.h.b16 %v1488
    %v2073 = vunpack.c.l.b16 %v1489
    %v2074 = vunpack.c.l.b16 %v1490
    %v2075 = vunpack.c.h.b16 %v1490
    %v2076 = vunpack.c.l.b16 %v1491
    %v2077 = vunpack.c.h.b16 %v1491
    %v2078 = vunpack.c.l.b16 %v1492
    %v2079 = vunpack.c.h.b16 %v1492
    %v2080 = vunpack.c.l.b16 %v1493
    %v2081 = vunpack.c.l.b16 %v1494
    %v2082 = vunpack.c.h.b16 %v1494
    %v2083 = vunpack.c.l.b16 %v1495
    %v2084 = vunpack.c.h.b16 %v1495
    %v2085 = vunpack.c.l.b16 %v1496
    %v2086 = vunpack.c.h.b16 %v1496
    %v2087 = vunpack.c.l.b16 %v1497
    %v2088 = vunpack.c.l.b16 %v1498
    %v2089 = vunpack.c.h.b16 %v1498
    %v2090 = vunpack.c.l.b16 %v1499
    %v2091 = vunpack.c.h.b16 %v1499
    %v2092 = vunpack.c.l.b16 %v1500
    %v2093 = vunpack.c.h.b16 %v1500
    %v2094 = vunpack.c.l.b16 %v1501
    %v2095 = vunpack.c.l.b16 %v1502
    %v2096 = vunpack.c.h.b16 %v1502
    %v2097 = vunpack.c.l.b16 %v1503
    %v2098 = vunpack.c.h.b16 %v1503
    %v2099 = vunpack.c.l.b16 %v1504
    %v2100 = vunpack.c.h.b16 %v1504
    %v2101 = vunpack.c.l.b16 %v1505
    %v2102 = vunpack.c.l.b16 %v1506
    %v2103 = vunpack.c.h.b16 %v1506
    %v2104 = vunpack.c.l.b16 %v1507
    %v2105 = vunpack.c.h.b16 %v1507
    %v2106 = vunpack.c.l.b16 %v1508
    %v2107 = vunpack.c.h.b16 %v1508
    %v2108 = vunpack.c.l.b16 %v1509
    %v2109 = vunpack.c.l.b16 %v1510
    %v2110 = vunpack.c.h.b16 %v1510
    %v2111 = vunpack.c.l.b16 %v1511
    %v2112 = vunpack.c.h.b16 %v1511
    %v2113 = vunpack.c.l.b16 %v1512
    %v2114 = vunpack.c.h.b16 %v1512
    %v2115 = vunpack.c.l.b16 %v1513
    %v2116 = vunpack.c.l.b16 %v1514
    %v2117 = vunpack.c.h.b16 %v1514
    %v2118 = vunpack.c.l.b16 %v1515
    %v2119 = vunpack.c.h.b16 %v1515
    %v2120 = vunpack.c.l.b16 %v1516
    %v2121 = vunpack.c.h.b16 %v1516
    %v2122 = vunpack.c.l.b16 %v1517
    %v2123 = vunpack.c.l.b16 %v1518
    %v2124 = vunpack.c.h.b16 %v1518
    %v2125 = vunpack.c.l.b16 %v1519
    %v2126 = vunpack.c.h.b16 %v1519
    %v2127 = vunpack.c.l.b16 %v1520
    %v2128 = vunpack.c.h.b16 %v1520
    %v2129 = vunpack.c.l.b16 %v1521
    %v2130 = vunpack.c.l.b16 %v1522
    %v2131 = vunpack.c.h.b16 %v1522
    %v2132 = vunpack.c.l.b16 %v1523
    %v2133 = vunpack.c.h.b16 %v1523
    %v2134 = vunpack.c.l.b16 %v1524
    %v2135 = vunpack.c.h.b16 %v1524
    %v2136 = vunpack.c.l.b16 %v1525
    %v2137 = vunpack.c.l.b16 %v1526
    %v2138 = vunpack.c.h.b16 %v1526
    %v2139 = vunpack.c.l.b16 %v1527
    %v2140 = vunpack.c.h.b16 %v1527
    %v2141 = vunpack.c.l.b16 %v1528
    %v2142 = vunpack.c.h.b16 %v1528
    %v2143 = vunpack.c.l.b16 %v1529
    %v2144 = vunpack.c.l.b16 %v1530
    %v2145 = vunpack.c.h.b16 %v1530
    %v2146 = vunpack.c.l.b16 %v1531
    %v2147 = vunpack.c.h.b16 %v1531
    %v2148 = vunpack.c.l.b16 %v1532
    %v2149 = vunpack.c.h.b16 %v1532
    %v2150 = vunpack.c.l.b16 %v1533
    %v2151 = vunpack.c.l.b16 %v1534
    %v2152 = vunpack.c.h.b16 %v1534
    %v2153 = vunpack.c.l.b16 %v1535
    %v2154 = vunpack.c.h.b16 %v1535
    %v2155 = vunpack.c.l.b16 %v1536
    %v2156 = vunpack.c.h.b16 %v1536
    %v2157 = vunpack.c.l.b16 %v1537
    %v2158 = vunpack.c.l.b16 %v1538
    %v2159 = vunpack.c.h.b16 %v1538
    %v2160 = vunpack.c.l.b16 %v1539
    %v2161 = vunpack.c.h.b16 %v1539
    %v2162 = vunpack.c.l.b16 %v1540
    %v2163 = vunpack.c.h.b16 %v1540
    %v2164 = vunpack.c.l.b16 %v1541
    %v2165 = vunpack.c.l.b16 %v1542
    %v2166 = vunpack.c.h.b16 %v1542
    %v2167 = vunpack.c.l.b16 %v1543
    %v2168 = vunpack.c.h.b16 %v1543
    %v2169 = vunpack.c.l.b16 %v1544
    %v2170 = vunpack.c.h.b16 %v1544
    %v2171 = vunpack.c.l.b16 %v1545
    %v2172 = vunpack.c.l.b16 %v1546
    %v2173 = vunpack.c.h.b16 %v1546
    %v2174 = vunpack.c.l.b16 %v1547
    %v2175 = vunpack.c.h.b16 %v1547
    %v2176 = vunpack.c.l.b16 %v1548
    %v2177 = vunpack.c.h.b16 %v1548
    %v2178 = vunpack.c.l.b16 %v1549
    %v2179 = vunpack.c.l.b16 %v1550
    %v2180 = vunpack.c.h.b16 %v1550
    %v2181 = vunpack.c.l.b16 %v1551
    %v2182 = vunpack.c.h.b16 %v1551
    %v2183 = vunpack.c.l.b16 %v1552
    %v2184 = vunpack.c.h.b16 %v1552
    %v2185 = vunpack.c.l.b16 %v1553
    %v2186 = vunpack.c.l.b16 %v1554
    %v2187 = vunpack.c.h.b16 %v1554
    %v2188 = vunpack.c.l.b16 %v1555
    %v2189 = vunpack.c.h.b16 %v1555
    %v2190 = vunpack.c.l.b16 %v1556
    %v2191 = vunpack.c.h.b16 %v1556
    %v2192 = vunpack.c.l.b16 %v1557
    %v2193 = vunpack.c.l.b16 %v1558
    %v2194 = vunpack.c.h.b16 %v1558
    %v2195 = vunpack.c.l.b16 %v1559
    %v2196 = vunpack.c.h.b16 %v1559
    %v2197 = vunpack.c.l.b16 %v1560
    %v2198 = vunpack.c.h.b16 %v1560
    %v2199 = vunpack.c.l.b16 %v1561
    %v2200 = vunpack.c.l.b16 %v1562
    %v2201 = vunpack.c.h.b16 %v1562
    %v2202 = vunpack.c.l.b16 %v1563
    %v2203 = vunpack.c.h.b16 %v1563
    %v2204 = vunpack.c.l.b16 %v1564
    %v2205 = vunpack.c.h.b16 %v1564
    %v2206 = vunpack.c.l.b16 %v1565
    %v2207 = vunpack.c.l.b16 %v1566
    %v2208 = vunpack.c.h.b16 %v1566
    %v2209 = vunpack.c.l.b16 %v1567
    %v2210 = vunpack.c.h.b16 %v1567
    %v2211 = vunpack.c.l.b16 %v1568
    %v2212 = vunpack.c.h.b16 %v1568
    %v2213 = vunpack.c.l.b16 %v1569
    %v2214 = vunpack.c.l.b16 %v1570
    %v2215 = vunpack.c.h.b16 %v1570
    %v2216 = vunpack.c.l.b16 %v1571
    %v2217 = vunpack.c.h.b16 %v1571
    %v2218 = vunpack.c.l.b16 %v1572
    %v2219 = vunpack.c.h.b16 %v1572
    %v2220 = vunpack.c.l.b16 %v1573
    %v2221 = vunpack.c.l.b16 %v1574
    %v2222 = vunpack.c.h.b16 %v1574
    %v2223 = vunpack.c.l.b16 %v1575
    %v2224 = vunpack.c.h.b16 %v1575
    %v2225 = vunpack.c.l.b16 %v1576
    %v2226 = vunpack.c.h.b16 %v1576
    %v2227 = vunpack.c.l.b16 %v1577
    %v2228 = vunpack.c.l.b16 %v1578
    %v2229 = vunpack.c.h.b16 %v1578
    %v2230 = vunpack.c.l.b16 %v1579
    %v2231 = vunpack.c.h.b16 %v1579
    %v2232 = vunpack.c.l.b16 %v1580
    %v2233 = vunpack.c.h.b16 %v1580
    %v2234 = vunpack.c.l.b16 %v1581
    %v2235 = vunpack.c.l.b16 %v1582
    %v2236 = vunpack.c.h.b16 %v1582
    %v2237 = vunpack.c.l.b16 %v1583
    %v2238 = vunpack.c.h.b16 %v1583
    %v2239 = vunpack.c.l.b16 %v1584
    %v2240 = vunpack.c.h.b16 %v1584
    %v2241 = vunpack.c.l.b16 %v1585
    %v2242 = vunpack.c.l.b16 %v1586
    %v2243 = vunpack.c.h.b16 %v1586
    %v2244 = vunpack.c.l.b16 %v1587
    %v2245 = vunpack.c.h.b16 %v1587
    %v2246 = vunpack.c.l.b16 %v1588
    %v2247 = vunpack.c.h.b16 %v1588
    %v2248 = vunpack.c.l.b16 %v1589
    %v2249 = vunpack.c.l.b16 %v1590
    %v2250 = vunpack.c.h.b16 %v1590
    %v2251 = vunpack.c.l.b16 %v1591
    %v2252 = vunpack.c.h.b16 %v1591
    %v2253 = vunpack.c.l.b16 %v1592
    %v2254 = vunpack.c.h.b16 %v1592
    %v2255 = vunpack.c.l.b16 %v1593
    %v2256 = vunpack.c.l.b16 %v1594
    %v2257 = vunpack.c.h.b16 %v1594
    %v2258 = vunpack.c.l.b16 %v1595
    %v2259 = vunpack.c.h.b16 %v1595
    %v2260 = vunpack.c.l.b16 %v1596
    %v2261 = vunpack.c.h.b16 %v1596
    %v2262 = vunpack.c.l.b16 %v1597
    %v2263 = vunpack.c.l.b16 %v1598
    %v2264 = vunpack.c.h.b16 %v1598
    %v2265 = vunpack.c.l.b16 %v1599
    %v2266 = vunpack.c.h.b16 %v1599
    %v2267 = vunpack.c.l.b16 %v1600
    %v2268 = vunpack.c.h.b16 %v1600
    %v2269 = vunpack.c.l.b16 %v1601
    %v2270 = vunpack.c.l.b16 %v1602
    %v2271 = vunpack.c.h.b16 %v1602
    %v2272 = vunpack.c.l.b16 %v1603
    %v2273 = vunpack.c.h.b16 %v1603
    %v2274 = vunpack.c.l.b16 %v1604
    %v2275 = vunpack.c.h.b16 %v1604
    %v2276 = vunpack.c.l.b16 %v1605
    %v2277 = vunpack.c.l.b16 %v1606
    %v2278 = vunpack.c.h.b16 %v1606
    %v2279 = vunpack.c.l.b16 %v1607
    %v2280 = vunpack.c.h.b16 %v1607
    %v2281 = vunpack.c.l.b16 %v1608
    %v2282 = vunpack.c.h.b16 %v1608
    %v2283 = vunpack.c.l.b16 %v1609
    %v2284 = vunpack.c.l.b16 %v1610
    %v2285 = vunpack.c.h.b16 %v1610
    %v2286 = vunpack.c.l.b16 %v1611
    %v2287 = vunpack.c.h.b16 %v1611
    %v2288 = vunpack.c.l.b16 %v1612
    %v2289 = vunpack.c.h.b16 %v1612
    %v2290 = vunpack.c.l.b16 %v1613
    %v2291 = vunpack.c.l.b16 %v1614
    %v2292 = vunpack.c.h.b16 %v1614
    %v2293 = vunpack.c.l.b16 %v1615
    %v2294 = vunpack.c.h.b16 %v1615
    %v2295 = vunpack.c.l.b16 %v1616
    %v2296 = vunpack.c.h.b16 %v1616
    %v2297 = vunpack.c.l.b16 %v1617
    %v2298 = vunpack.c.l.b16 %v1618
    %v2299 = vunpack.c.h.b16 %v1618
    %v2300 = vunpack.c.l.b16 %v1619
    %v2301 = vunpack.c.h.b16 %v1619
    %v2302 = vunpack.c.l.b16 %v1620
    %v2303 = vunpack.c.h.b16 %v1620
    %v2304 = vunpack.c.l.b16 %v1621
    %v2305 = vunpack.c.l.b16 %v1622
    %v2306 = vunpack.c.h.b16 %v1622
    %v2307 = vunpack.c.l.b16 %v1623
    %v2308 = vunpack.c.h.b16 %v1623
    %v2309 = vunpack.c.l.b16 %v1624
    %v2310 = vunpack.c.h.b16 %v1624
    %v2311 = vunpack.c.l.b16 %v1625
    %v2312 = vunpack.c.l.b16 %v1626
    %v2313 = vunpack.c.h.b16 %v1626
    %v2314 = vunpack.c.l.b16 %v1627
    %v2315 = vunpack.c.h.b16 %v1627
    %v2316 = vunpack.c.l.b16 %v1628
    %v2317 = vunpack.c.h.b16 %v1628
    %v2318 = vunpack.c.l.b16 %v1629
    %v2319 = vunpack.c.l.b16 %v1630
    %v2320 = vunpack.c.h.b16 %v1630
    %v2321 = vunpack.c.l.b16 %v1631
    %v2322 = vunpack.c.h.b16 %v1631
    %v2323 = vunpack.c.l.b16 %v1632
    %v2324 = vunpack.c.h.b16 %v1632
    %v2325 = vunpack.c.l.b16 %v1633
    %v2326 = vunpack.c.l.b16 %v1634
    %v2327 = vunpack.c.h.b16 %v1634
    %v2328 = vunpack.c.l.b16 %v1635
    %v2329 = vunpack.c.h.b16 %v1635
    %v2330 = vunpack.c.l.b16 %v1636
    %v2331 = vunpack.c.h.b16 %v1636
    %v2332 = vunpack.c.l.b16 %v1637
    %v2333 = vunpack.c.l.b16 %v1638
    %v2334 = vunpack.c.h.b16 %v1638
    %v2335 = vunpack.c.l.b16 %v1639
    %v2336 = vunpack.c.h.b16 %v1639
    %v2337 = vunpack.c.l.b16 %v1640
    %v2338 = vunpack.c.h.b16 %v1640
    %v2339 = vunpack.c.l.b16 %v1641
    %v2340 = vunpack.c.l.b16 %v1642
    %v2341 = vunpack.c.h.b16 %v1642
    %v2342 = vunpack.c.l.b16 %v1643
    %v2343 = vunpack.c.h.b16 %v1643
    %v2344 = vunpack.c.l.b16 %v1644
    %v2345 = vunpack.c.h.b16 %v1644
    %v2346 = vunpack.c.l.b16 %v1645
    %v2347 = vunpack.c.l.b16 %v1646
    %v2348 = vunpack.c.h.b16 %v1646
    %v2349 = vunpack.c.l.b16 %v1647
    %v2350 = vunpack.c.h.b16 %v1647
    %v2351 = vunpack.c.l.b16 %v1648
    %v2352 = vunpack.c.h.b16 %v1648
    %v2353 = vunpack.c.l.b16 %v1649
    %v2354 = vpack.c.b16 %v1913, %v1906
    %v2355 = vpack.c.b16 %v1914, %v1907
    %v2356 = vpack.c.b16 %v1915, %v1908
    %v2357 = vpack.c.b16 %v1916, %v1909
    %v2358 = vpack.c.b16 %v1917, %v1910
    %v2359 = vpack.c.b16 %v1918, %v1911
    %v2360 = vpack.c.b16 %v1919, %v1912
    %v2361 = vpack.c.b16 %v1927, %v1920
    %v2362 = vpack.c.b16 %v1928, %v1921
    %v2363 = vpack.c.b16 %v1929, %v1922
    %v2364 = vpack.c.b16 %v1930, %v1923
    %v2365 = vpack.c.b16 %v1931, %v1924
    %v2366 = vpack.c.b16 %v1932, %v1925
    %v2367 = vpack.c.b16 %v1933, %v1926
    %v2368 = vpack.c.b16 %v1941, %v1934
    %v2369 = vpack.c.b16 %v1942, %v1935
    %v2370 = vpack.c.b16 %v1943, %v1936
    %v2371 = vpack.c.b16 %v1944, %v1937
    %v2372 = vpack.c.b16 %v1945, %v1938
    %v2373 = vpack.c.b16 %v1946, %v1939
    %v2374 = vpack.c.b16 %v1947, %v1940
    %v2375 = vpack.c.b16 %v1955, %v1948
    %v2376 = vpack.c.b16 %v1956, %v1949
    %v2377 = vpack.c.b16 %v1957, %v1950
    %v2378 = vpack.c.b16 %v1958, %v1951
    %v2379 = vpack.c.b16 %v1959, %v1952
    %v2380 = vpack.c.b16 %v1960, %v1953
    %v2381 = vpack.c.b16 %v1961, %v1954
    %v2382 = vpack.c.b16 %v1969, %v1962
    %v2383 = vpack.c.b16 %v1970, %v1963
    %v2384 = vpack.c.b16 %v1971, %v1964
    %v2385 = vpack.c.b16 %v1972, %v1965
    %v2386 = vpack.c.b16 %v1973, %v1966
    %v2387 = vpack.c.b16 %v1974, %v1967
    %v2388 = vpack.c.b16 %v1975, %v1968
    %v2389 = vpack.c.b16 %v1983, %v1976
    %v2390 = vpack.c.b16 %v1984, %v1977
    %v2391 = vpack.c.b16 %v1985, %v1978
    %v2392 = vpack.c.b16 %v1986, %v1979
    %v2393 = vpack.c.b16 %v1987, %v1980
    %v2394 = vpack.c.b16 %v1988, %v1981
    %v2395 = vpack.c.b16 %v1989, %v1982
    %v2396 = vpack.c.b16 %v1997, %v1990
    %v2397 = vpack.c.b16 %v1998, %v1991
    %v2398 = vpack.c.b16 %v1999, %v1992
    %v2399 = vpack.c.b16 %v2000, %v1993
    %v2400 = vpack.c.b16 %v2001, %v1994
    %v2401 = vpack.c.b16 %v2002, %v1995
    %v2402 = vpack.c.b16 %v2003, %v1996
    %v2403 = vpack.c.b16 %v2011, %v2004
    %v2404 = vpack.c.b16 %v2012, %v2005
    %v2405 = vpack.c.b16 %v2013, %v2006
    %v2406 = vpack.c.b16 %v2014, %v2007
    %v2407 = vpack.c.b16 %v2015, %v2008
    %v2408 = vpack.c.b16 %v2016, %v2009
    %v2409 = vpack.c.b16 %v2017, %v2010
    %v2410 = vpack.c.b16 %v2025, %v2018
    %v2411 = vpack.c.b16 %v2026, %v2019
    %v2412 = vpack.c.b16 %v2027, %v2020
    %v2413 = vpack.c.b16 %v2028, %v2021
    %v2414 = vpack.c.b16 %v2029, %v2022
    %v2415 = vpack.c.b16 %v2030, %v2023
    %v2416 = vpack.c.b16 %v2031, %v2024
    %v2417 = vpack.c.b16 %v2039, %v2032
    %v2418 = vpack.c.b16 %v2040, %v2033
    %v2419 = vpack.c.b16 %v2041, %v2034
    %v2420 = vpack.c.b16 %v2042, %v2035
    %v2421 = vpack.c.b16 %v2043, %v2036
    %v2422 = vpack.c.b16 %v2044, %v2037
    %v2423 = vpack.c.b16 %v2045, %v2038
    %v2424 = vpack.c.b16 %v2053, %v2046
    %v2425 = vpack.c.b16 %v2054, %v2047
    %v2426 = vpack.c.b16 %v2055, %v2048
    %v2427 = vpack.c.b16 %v2056, %v2049
    %v2428 = vpack.c.b16 %v2057, %v2050
    %v2429 = vpack.c.b16 %v2058, %v2051
    %v2430 = vpack.c.b16 %v2059, %v2052
    %v2431 = vpack.c.b16 %v2067, %v2060
    %v2432 = vpack.c.b16 %v2068, %v2061
    %v2433 = vpack.c.b16 %v2069, %v2062
    %v2434 = vpack.c.b16 %v2070, %v2063
    %v2435 = vpack.c.b16 %v2071, %v2064
    %v2436 = vpack.c.b16 %v2072, %v2065
    %v2437 = vpack.c.b16 %v2073, %v2066
    %v2438 = vpack.c.b16 %v2081, %v2074
    %v2439 = vpack.c.b16 %v2082, %v2075
    %v2440 = vpack.c.b16 %v2083, %v2076
    %v2441 = vpack.c.b16 %v2084, %v2077
    %v2442 = vpack.c.b16 %v2085, %v2078
    %v2443 = vpack.c.b16 %v2086, %v2079
    %v2444 = vpack.c.b16 %v2087, %v2080
    %v2445 = vpack.c.b16 %v2095, %v2088
    %v2446 = vpack.c.b16 %v2096, %v2089
    %v2447 = vpack.c.b16 %v2097, %v2090
    %v2448 = vpack.c.b16 %v2098, %v2091
    %v2449 = vpack.c.b16 %v2099, %v2092
    %v2450 = vpack.c.b16 %v2100, %v2093
    %v2451 = vpack.c.b16 %v2101, %v2094
    %v2452 = vpack.c.b16 %v2109, %v2102
    %v2453 = vpack.c.b16 %v2110, %v2103
    %v2454 = vpack.c.b16 %v2111, %v2104
    %v2455 = vpack.c.b16 %v2112, %v2105
    %v2456 = vpack.c.b16 %v2113, %v2106
    %v2457 = vpack.c.b16 %v2114, %v2107
    %v2458 = vpack.c.b16 %v2115, %v2108
    %v2459 = vpack.c.b16 %v2123, %v2116
    %v2460 = vpack.c.b16 %v2124, %v2117
    %v2461 = vpack.c.b16 %v2125, %v2118
    %v2462 = vpack.c.b16 %v2126, %v2119
    %v2463 = vpack.c.b16 %v2127, %v2120
    %v2464 = vpack.c.b16 %v2128, %v2121
    %v2465 = vpack.c.b16 %v2129, %v2122
    %v2466 = vpack.c.b16 %v2137, %v2130
    %v2467 = vpack.c.b16 %v2138, %v2131
    %v2468 = vpack.c.b16 %v2139, %v2132
    %v2469 = vpack.c.b16 %v2140, %v2133
    %v2470 = vpack.c.b16 %v2141, %v2134
    %v2471 = vpack.c.b16 %v2142, %v2135
    %v2472 = vpack.c.b16 %v2143, %v2136
    %v2473 = vpack.c.b16 %v2151, %v2144
    %v2474 = vpack.c.b16 %v2152, %v2145
    %v2475 = vpack.c.b16 %v2153, %v2146
    %v2476 = vpack.c.b16 %v2154, %v2147
    %v2477 = vpack.c.b16 %v2155, %v2148
    %v2478 = vpack.c.b16 %v2156, %v2149
    %v2479 = vpack.c.b16 %v2157, %v2150
    %v2480 = vpack.c.b16 %v2165, %v2158
    %v2481 = vpack.c.b16 %v2166, %v2159
    %v2482 = vpack.c.b16 %v2167, %v2160
    %v2483 = vpack.c.b16 %v2168, %v2161
    %v2484 = vpack.c.b16 %v2169, %v2162
    %v2485 = vpack.c.b16 %v2170, %v2163
    %v2486 = vpack.c.b16 %v2171, %v2164
    %v2487 = vpack.c.b16 %v2179, %v2172
    %v2488 = vpack.c.b16 %v2180, %v2173
    %v2489 = vpack.c.b16 %v2181, %v2174
    %v2490 = vpack.c.b16 %v2182, %v2175
    %v2491 = vpack.c.b16 %v2183, %v2176
    %v2492 = vpack.c.b16 %v2184, %v2177
    %v2493 = vpack.c.b16 %v2185, %v2178
    %v2494 = vpack.c.b16 %v2193, %v2186
    %v2495 = vpack.c.b16 %v2194, %v2187
    %v2496 = vpack.c.b16 %v2195, %v2188
    %v2497 = vpack.c.b16 %v2196, %v2189
    %v2498 = vpack.c.b16 %v2197, %v2190
    %v2499 = vpack.c.b16 %v2198, %v2191
    %v2500 = vpack.c.b16 %v2199, %v2192
    %v2501 = vpack.c.b16 %v2207, %v2200
    %v2502 = vpack.c.b16 %v2208, %v2201
    %v2503 = vpack.c.b16 %v2209, %v2202
    %v2504 = vpack.c.b16 %v2210, %v2203
    %v2505 = vpack.c.b16 %v2211, %v2204
    %v2506 = vpack.c.b16 %v2212, %v2205
    %v2507 = vpack.c.b16 %v2213, %v2206
    %v2508 = vpack.c.b16 %v2221, %v2214
    %v2509 = vpack.c.b16 %v2222, %v2215
    %v2510 = vpack.c.b16 %v2223, %v2216
    %v2511 = vpack.c.b16 %v2224, %v2217
    %v2512 = vpack.c.b16 %v2225, %v2218
    %v2513 = vpack.c.b16 %v2226, %v2219
    %v2514 = vpack.c.b16 %v2227, %v2220
    %v2515 = vpack.c.b16 %v2235, %v2228
    %v2516 = vpack.c.b16 %v2236, %v2229
    %v2517 = vpack.c.b16 %v2237, %v2230
    %v2518 = vpack.c.b16 %v2238, %v2231
    %v2519 = vpack.c.b16 %v2239, %v2232
    %v2520 = vpack.c.b16 %v2240, %v2233
    %v2521 = vpack.c.b16 %v2241, %v2234
    %v2522 = vpack.c.b16 %v2249, %v2242
    %v2523 = vpack.c.b16 %v2250, %v2243
    %v2524 = vpack.c.b16 %v2251, %v2244
    %v2525 = vpack.c.b16 %v2252, %v2245
    %v2526 = vpack.c.b16 %v2253, %v2246
    %v2527 = vpack.c.b16 %v2254, %v2247
    %v2528 = vpack.c.b16 %v2255, %v2248
    %v2529 = vpack.c.b16 %v2263, %v2256
    %v2530 = vpack.c.b16 %v2264, %v2257
    %v2531 = vpack.c.b16 %v2265, %v2258
    %v2532 = vpack.c.b16 %v2266, %v2259
    %v2533 = vpack.c.b16 %v2267, %v2260
    %v2534 = vpack.c.b16 %v2268, %v2261
    %v2535 = vpack.c.b16 %v2269, %v2262
    %v2536 = vpack.c.b16 %v2277, %v2270
    %v2537 = vpack.c.b16 %v2278, %v2271
    %v2538 = vpack.c.b16 %v2279, %v2272
    %v2539 = vpack.c.b16 %v2280, %v2273
    %v2540 = vpack.c.b16 %v2281, %v2274
    %v2541 = vpack.c.b16 %v2282, %v2275
    %v2542 = vpack.c.b16 %v2283, %v2276
    %v2543 = vpack.c.b16 %v2291, %v2284
    %v2544 = vpack.c.b16 %v2292, %v2285
    %v2545 = vpack.c.b16 %v2293, %v2286
    %v2546 = vpack.c.b16 %v2294, %v2287
    %v2547 = vpack.c.b16 %v2295, %v2288
    %v2548 = vpack.c.b16 %v2296, %v2289
    %v2549 = vpack.c.b16 %v2297, %v2290
    %v2550 = vpack.c.b16 %v2305, %v2298
    %v2551 = vpack.c.b16 %v2306, %v2299
    %v2552 = vpack.c.b16 %v2307, %v2300
    %v2553 = vpack.c.b16 %v2308, %v2301
    %v2554 = vpack.c.b16 %v2309, %v2302
    %v2555 = vpack.c.b16 %v2310, %v2303
    %v2556 = vpack.c.b16 %v2311, %v2304
    %v2557 = vpack.c.b16 %v2319, %v2312
    %v2558 = vpack.c.b16 %v2320, %v2313
    %v2559 = vpack.c.b16 %v2321, %v2314
    %v2560 = vpack.c.b16 %v2322, %v2315
    %v2561 = vpack.c.b16 %v2323, %v2316
    %v2562 = vpack.c.b16 %v2324, %v2317
    %v2563 = vpack.c.b16 %v2325, %v2318
    %v2564 = vpack.c.b16 %v2333, %v2326
    %v2565 = vpack.c.b16 %v2334, %v2327
    %v2566 = vpack.c.b16 %v2335, %v2328
    %v2567 = vpack.c.b16 %v2336, %v2329
    %v2568 = vpack.c.b16 %v2337, %v2330
    %v2569 = vpack.c.b16 %v2338, %v2331
    %v2570 = vpack.c.b16 %v2339, %v2332
    %v2571 = vpack.c.b16 %v2347, %v2340
    %v2572 = vpack.c.b16 %v2348, %v2341
    %v2573 = vpack.c.b16 %v2349, %v2342
    %v2574 = vpack.c.b16 %v2350, %v2343
    %v2575 = vpack.c.b16 %v2351, %v2344
    %v2576 = vpack.c.b16 %v2352, %v2345
    %v2577 = vpack.c.b16 %v2353, %v2346
    %2802 = vmatprep.subr.bf16.mxu0 %v2404
    %2803 = vmatpush1.bf16.msra.mxu0 %v2403
    %2804 = vmatprep.subr.bf16.mxu0 %v2397
    %2805 = vmatpush1.bf16.msra.mxu0 %v2396
    %2806 = vmatprep.subr.bf16.mxu0 %v2390
    %2807 = vmatpush1.bf16.msra.mxu0 %v2389
    %2808 = vmatprep.subr.bf16.mxu0 %v2383
    %2809 = vmatpush1.bf16.msra.mxu0 %v2382
    %2810 = vmatprep.subr.bf16.mxu0 %v2376
    %2811 = vmatpush1.bf16.msra.mxu0 %v2375
    %2812 = vmatprep.subr.bf16.mxu0 %v2369
    %2813 = vmatpush1.bf16.msra.mxu0 %v2368
    %2814 = vmatprep.subr.bf16.mxu0 %v2362
    %2815 = vmatpush1.bf16.msra.mxu0 %v2361
    %2816 = vmatprep.subr.bf16.mxu0 %v2355
    %2817 = vmatpush1.bf16.msra.mxu0 %v2354
    %2818 = vmatprep.subr.bf16.mxu0 %v2460
    %2819 = vmatpush2.bf16.msra.mxu0 %v2459
    %2820 = vmatprep.subr.bf16.mxu0 %v2453
    %2821 = vmatpush2.bf16.msra.mxu0 %v2452
    %2822 = vmatprep.subr.bf16.mxu0 %v2446
    %2823 = vmatpush2.bf16.msra.mxu0 %v2445
    %2824 = vmatprep.subr.bf16.mxu0 %v2439
    %2825 = vmatpush2.bf16.msra.mxu0 %v2438
    %2826 = vmatprep.subr.bf16.mxu0 %v2432
    %2827 = vmatpush2.bf16.msra.mxu0 %v2431
    %2828 = vmatprep.subr.bf16.mxu0 %v2425
    %2829 = vmatpush2.bf16.msra.mxu0 %v2424
    %2830 = vmatprep.subr.bf16.mxu0 %v2418
    %2831 = vmatpush2.bf16.msra.mxu0 %v2417
    %2832 = vmatprep.subr.bf16.mxu0 %v2411
    %2833 = vmatpush2.bf16.msra.mxu0 %v2410
    %2834 = vmatprep.mubr.bf16.mxu0 %v1391
    %2835 = vmatmul.mubr.bf16.gmra.mxu0 %v1390
    %v2836 = vpop.f32.mrf.mxu0
    %v2837 = vadd.f32 0.0, %v2836
    %v2838 = vpop.f32.mrf.mxu0
    %v2839 = vadd.f32 0.0, %v2838
    %v2840 = vpop.f32.mrf.mxu0
    %v2841 = vpop.f32.mrf.mxu0
    %2842 = vdwg.mxu0
    %2843 = vmatprep.subr.bf16.mxu0 %v2516
    %2844 = vmatpush1.bf16.msra.mxu0 %v2515
    %2845 = vmatprep.subr.bf16.mxu0 %v2509
    %2846 = vmatpush1.bf16.msra.mxu0 %v2508
    %2847 = vmatprep.subr.bf16.mxu0 %v2502
    %2848 = vmatpush1.bf16.msra.mxu0 %v2501
    %2849 = vmatprep.subr.bf16.mxu0 %v2495
    %2850 = vmatpush1.bf16.msra.mxu0 %v2494
    %2851 = vmatprep.subr.bf16.mxu0 %v2488
    %2852 = vmatpush1.bf16.msra.mxu0 %v2487
    %2853 = vmatprep.subr.bf16.mxu0 %v2481
    %2854 = vmatpush1.bf16.msra.mxu0 %v2480
    %2855 = vmatprep.subr.bf16.mxu0 %v2474
    %2856 = vmatpush1.bf16.msra.mxu0 %v2473
    %2857 = vmatprep.subr.bf16.mxu0 %v2467
    %2858 = vmatpush1.bf16.msra.mxu0 %v2466
    %2859 = vmatprep.subr.bf16.mxu0 %v2572
    %2860 = vmatpush2.bf16.msra.mxu0 %v2571
    %2861 = vmatprep.subr.bf16.mxu0 %v2565
    %2862 = vmatpush2.bf16.msra.mxu0 %v2564
    %2863 = vmatprep.subr.bf16.mxu0 %v2558
    %2864 = vmatpush2.bf16.msra.mxu0 %v2557
    %2865 = vmatprep.subr.bf16.mxu0 %v2551
    %2866 = vmatpush2.bf16.msra.mxu0 %v2550
    %2867 = vmatprep.subr.bf16.mxu0 %v2544
    %2868 = vmatpush2.bf16.msra.mxu0 %v2543
    %2869 = vmatprep.subr.bf16.mxu0 %v2537
    %2870 = vmatpush2.bf16.msra.mxu0 %v2536
    %2871 = vmatprep.subr.bf16.mxu0 %v2530
    %2872 = vmatpush2.bf16.msra.mxu0 %v2529
    %2873 = vmatprep.subr.bf16.mxu0 %v2523
    %2874 = vmatpush2.bf16.msra.mxu0 %v2522
    %2875 = vmatprep.mubr.bf16.mxu0 %v1393
    %2876 = vmatmul.mubr.bf16.gmra.mxu0 %v1392
    %v2877 = vpop.f32.mrf.mxu0
    %v2878 = vadd.f32 %v2837, %v2877
    %v2879 = vpop.f32.mrf.mxu0
    %v2880 = vadd.f32 %v2839, %v2879
    %v2881 = vpop.f32.mrf.mxu0
    %v2882 = vpop.f32.mrf.mxu0
    %2883 = vdwg.mxu0
    %2884 = vmatprep.subr.bf16.mxu0 %v2406
    %2885 = vmatpush1.bf16.msra.mxu0 %v2405
    %2886 = vmatprep.subr.bf16.mxu0 %v2399
    %2887 = vmatpush1.bf16.msra.mxu0 %v2398
    %2888 = vmatprep.subr.bf16.mxu0 %v2392
    %2889 = vmatpush1.bf16.msra.mxu0 %v2391
    %2890 = vmatprep.subr.bf16.mxu0 %v2385
    %2891 = vmatpush1.bf16.msra.mxu0 %v2384
    %2892 = vmatprep.subr.bf16.mxu0 %v2378
    %2893 = vmatpush1.bf16.msra.mxu0 %v2377
    %2894 = vmatprep.subr.bf16.mxu0 %v2371
    %2895 = vmatpush1.bf16.msra.mxu0 %v2370
    %2896 = vmatprep.subr.bf16.mxu0 %v2364
    %2897 = vmatpush1.bf16.msra.mxu0 %v2363
    %2898 = vmatprep.subr.bf16.mxu0 %v2357
    %2899 = vmatpush1.bf16.msra.mxu0 %v2356
    %2900 = vmatprep.subr.bf16.mxu0 %v2462
    %2901 = vmatpush2.bf16.msra.mxu0 %v2461
    %2902 = vmatprep.subr.bf16.mxu0 %v2455
    %2903 = vmatpush2.bf16.msra.mxu0 %v2454
    %2904 = vmatprep.subr.bf16.mxu0 %v2448
    %2905 = vmatpush2.bf16.msra.mxu0 %v2447
    %2906 = vmatprep.subr.bf16.mxu0 %v2441
    %2907 = vmatpush2.bf16.msra.mxu0 %v2440
    %2908 = vmatprep.subr.bf16.mxu0 %v2434
    %2909 = vmatpush2.bf16.msra.mxu0 %v2433
    %2910 = vmatprep.subr.bf16.mxu0 %v2427
    %2911 = vmatpush2.bf16.msra.mxu0 %v2426
    %2912 = vmatprep.subr.bf16.mxu0 %v2420
    %2913 = vmatpush2.bf16.msra.mxu0 %v2419
    %2914 = vmatprep.subr.bf16.mxu0 %v2413
    %2915 = vmatpush2.bf16.msra.mxu0 %v2412
    %2916 = vmatprep.mubr.bf16.mxu0 %v1391
    %2917 = vmatmul.mubr.bf16.gmra.mxu0 %v1390
    %v2918 = vpop.f32.mrf.mxu0
    %v2919 = vadd.f32 0.0, %v2918
    %v2920 = vpop.f32.mrf.mxu0
    %v2921 = vadd.f32 0.0, %v2920
    %v2922 = vpop.f32.mrf.mxu0
    %v2923 = vpop.f32.mrf.mxu0
    %2924 = vdwg.mxu0
    %2925 = vmatprep.subr.bf16.mxu0 %v2518
    %2926 = vmatpush1.bf16.msra.mxu0 %v2517
    %2927 = vmatprep.subr.bf16.mxu0 %v2511
    %2928 = vmatpush1.bf16.msra.mxu0 %v2510
    %2929 = vmatprep.subr.bf16.mxu0 %v2504
    %2930 = vmatpush1.bf16.msra.mxu0 %v2503
    %2931 = vmatprep.subr.bf16.mxu0 %v2497
    %2932 = vmatpush1.bf16.msra.mxu0 %v2496
    %2933 = vmatprep.subr.bf16.mxu0 %v2490
    %2934 = vmatpush1.bf16.msra.mxu0 %v2489
    %2935 = vmatprep.subr.bf16.mxu0 %v2483
    %2936 = vmatpush1.bf16.msra.mxu0 %v2482
    %2937 = vmatprep.subr.bf16.mxu0 %v2476
    %2938 = vmatpush1.bf16.msra.mxu0 %v2475
    %2939 = vmatprep.subr.bf16.mxu0 %v2469
    %2940 = vmatpush1.bf16.msra.mxu0 %v2468
    %2941 = vmatprep.subr.bf16.mxu0 %v2574
    %2942 = vmatpush2.bf16.msra.mxu0 %v2573
    %2943 = vmatprep.subr.bf16.mxu0 %v2567
    %2944 = vmatpush2.bf16.msra.mxu0 %v2566
    %2945 = vmatprep.subr.bf16.mxu0 %v2560
    %2946 = vmatpush2.bf16.msra.mxu0 %v2559
    %2947 = vmatprep.subr.bf16.mxu0 %v2553
    %2948 = vmatpush2.bf16.msra.mxu0 %v2552
    %2949 = vmatprep.subr.bf16.mxu0 %v2546
    %2950 = vmatpush2.bf16.msra.mxu0 %v2545
    %2951 = vmatprep.subr.bf16.mxu0 %v2539
    %2952 = vmatpush2.bf16.msra.mxu0 %v2538
    %2953 = vmatprep.subr.bf16.mxu0 %v2532
    %2954 = vmatpush2.bf16.msra.mxu0 %v2531
    %2955 = vmatprep.subr.bf16.mxu0 %v2525
    %2956 = vmatpush2.bf16.msra.mxu0 %v2524
    %2957 = vmatprep.mubr.bf16.mxu0 %v1393
    %2958 = vmatmul.mubr.bf16.gmra.mxu0 %v1392
    %v2959 = vpop.f32.mrf.mxu0
    %v2960 = vadd.f32 %v2919, %v2959
    %v2961 = vpop.f32.mrf.mxu0
    %v2962 = vadd.f32 %v2921, %v2961
    %v2963 = vpop.f32.mrf.mxu0
    %v2964 = vpop.f32.mrf.mxu0
    %2965 = vdwg.mxu0
    %2966 = vmatprep.subr.bf16.mxu0 %v2408
    %2967 = vmatpush1.bf16.msra.mxu0 %v2407
    %2968 = vmatprep.subr.bf16.mxu0 %v2401
    %2969 = vmatpush1.bf16.msra.mxu0 %v2400
    %2970 = vmatprep.subr.bf16.mxu0 %v2394
    %2971 = vmatpush1.bf16.msra.mxu0 %v2393
    %2972 = vmatprep.subr.bf16.mxu0 %v2387
    %2973 = vmatpush1.bf16.msra.mxu0 %v2386
    %2974 = vmatprep.subr.bf16.mxu0 %v2380
    %2975 = vmatpush1.bf16.msra.mxu0 %v2379
    %2976 = vmatprep.subr.bf16.mxu0 %v2373
    %2977 = vmatpush1.bf16.msra.mxu0 %v2372
    %2978 = vmatprep.subr.bf16.mxu0 %v2366
    %2979 = vmatpush1.bf16.msra.mxu0 %v2365
    %2980 = vmatprep.subr.bf16.mxu0 %v2359
    %2981 = vmatpush1.bf16.msra.mxu0 %v2358
    %2982 = vmatprep.subr.bf16.mxu0 %v2464
    %2983 = vmatpush2.bf16.msra.mxu0 %v2463
    %2984 = vmatprep.subr.bf16.mxu0 %v2457
    %2985 = vmatpush2.bf16.msra.mxu0 %v2456
    %2986 = vmatprep.subr.bf16.mxu0 %v2450
    %2987 = vmatpush2.bf16.msra.mxu0 %v2449
    %2988 = vmatprep.subr.bf16.mxu0 %v2443
    %2989 = vmatpush2.bf16.msra.mxu0 %v2442
    %2990 = vmatprep.subr.bf16.mxu0 %v2436
    %2991 = vmatpush2.bf16.msra.mxu0 %v2435
    %2992 = vmatprep.subr.bf16.mxu0 %v2429
    %2993 = vmatpush2.bf16.msra.mxu0 %v2428
    %2994 = vmatprep.subr.bf16.mxu0 %v2422
    %2995 = vmatpush2.bf16.msra.mxu0 %v2421
    %2996 = vmatprep.subr.bf16.mxu0 %v2415
    %2997 = vmatpush2.bf16.msra.mxu0 %v2414
    %2998 = vmatprep.mubr.bf16.mxu0 %v1391
    %2999 = vmatmul.mubr.bf16.gmra.mxu0 %v1390
    %v3000 = vpop.f32.mrf.mxu0
    %v3001 = vadd.f32 0.0, %v3000
    %v3002 = vpop.f32.mrf.mxu0
    %v3003 = vadd.f32 0.0, %v3002
    %v3004 = vpop.f32.mrf.mxu0
    %v3005 = vpop.f32.mrf.mxu0
    %3006 = vdwg.mxu0
    %3007 = vmatprep.subr.bf16.mxu0 %v2520
    %3008 = vmatpush1.bf16.msra.mxu0 %v2519
    %3009 = vmatprep.subr.bf16.mxu0 %v2513
    %3010 = vmatpush1.bf16.msra.mxu0 %v2512
    %3011 = vmatprep.subr.bf16.mxu0 %v2506
    %3012 = vmatpush1.bf16.msra.mxu0 %v2505
    %3013 = vmatprep.subr.bf16.mxu0 %v2499
    %3014 = vmatpush1.bf16.msra.mxu0 %v2498
    %3015 = vmatprep.subr.bf16.mxu0 %v2492
    %3016 = vmatpush1.bf16.msra.mxu0 %v2491
    %3017 = vmatprep.subr.bf16.mxu0 %v2485
    %3018 = vmatpush1.bf16.msra.mxu0 %v2484
    %3019 = vmatprep.subr.bf16.mxu0 %v2478
    %3020 = vmatpush1.bf16.msra.mxu0 %v2477
    %3021 = vmatprep.subr.bf16.mxu0 %v2471
    %3022 = vmatpush1.bf16.msra.mxu0 %v2470
    %3023 = vmatprep.subr.bf16.mxu0 %v2576
    %3024 = vmatpush2.bf16.msra.mxu0 %v2575
    %3025 = vmatprep.subr.bf16.mxu0 %v2569
    %3026 = vmatpush2.bf16.msra.mxu0 %v2568
    %3027 = vmatprep.subr.bf16.mxu0 %v2562
    %3028 = vmatpush2.bf16.msra.mxu0 %v2561
    %3029 = vmatprep.subr.bf16.mxu0 %v2555
    %3030 = vmatpush2.bf16.msra.mxu0 %v2554
    %3031 = vmatprep.subr.bf16.mxu0 %v2548
    %3032 = vmatpush2.bf16.msra.mxu0 %v2547
    %3033 = vmatprep.subr.bf16.mxu0 %v2541
    %3034 = vmatpush2.bf16.msra.mxu0 %v2540
    %3035 = vmatprep.subr.bf16.mxu0 %v2534
    %3036 = vmatpush2.bf16.msra.mxu0 %v2533
    %3037 = vmatprep.subr.bf16.mxu0 %v2527
    %3038 = vmatpush2.bf16.msra.mxu0 %v2526
    %3039 = vmatprep.mubr.bf16.mxu0 %v1393
    %3040 = vmatmul.mubr.bf16.gmra.mxu0 %v1392
    %v3041 = vpop.f32.mrf.mxu0
    %v3042 = vadd.f32 %v3001, %v3041
    %v3043 = vpop.f32.mrf.mxu0
    %v3044 = vadd.f32 %v3003, %v3043
    %v3045 = vpop.f32.mrf.mxu0
    %v3046 = vpop.f32.mrf.mxu0
    %3047 = vdwg.mxu0
    %3048 = vmatprep.subr.bf16.mxu0 0
    %3049 = vmatpush1.bf16.msra.mxu0 %v2409
    %3050 = vmatprep.subr.bf16.mxu0 0
    %3051 = vmatpush1.bf16.msra.mxu0 %v2402
    %3052 = vmatprep.subr.bf16.mxu0 0
    %3053 = vmatpush1.bf16.msra.mxu0 %v2395
    %3054 = vmatprep.subr.bf16.mxu0 0
    %3055 = vmatpush1.bf16.msra.mxu0 %v2388
    %3056 = vmatprep.subr.bf16.mxu0 0
    %3057 = vmatpush1.bf16.msra.mxu0 %v2381
    %3058 = vmatprep.subr.bf16.mxu0 0
    %3059 = vmatpush1.bf16.msra.mxu0 %v2374
    %3060 = vmatprep.subr.bf16.mxu0 0
    %3061 = vmatpush1.bf16.msra.mxu0 %v2367
    %3062 = vmatprep.subr.bf16.mxu0 0
    %3063 = vmatpush1.bf16.msra.mxu0 %v2360
    %3064 = vmatprep.subr.bf16.mxu0 0
    %3065 = vmatpush2.bf16.msra.mxu0 %v2465
    %3066 = vmatprep.subr.bf16.mxu0 0
    %3067 = vmatpush2.bf16.msra.mxu0 %v2458
    %3068 = vmatprep.subr.bf16.mxu0 0
    %3069 = vmatpush2.bf16.msra.mxu0 %v2451
    %3070 = vmatprep.subr.bf16.mxu0 0
    %3071 = vmatpush2.bf16.msra.mxu0 %v2444
    %3072 = vmatprep.subr.bf16.mxu0 0
    %3073 = vmatpush2.bf16.msra.mxu0 %v2437
    %3074 = vmatprep.subr.bf16.mxu0 0
    %3075 = vmatpush2.bf16.msra.mxu0 %v2430
    %3076 = vmatprep.subr.bf16.mxu0 0
    %3077 = vmatpush2.bf16.msra.mxu0 %v2423
    %3078 = vmatprep.subr.bf16.mxu0 0
    %3079 = vmatpush2.bf16.msra.mxu0 %v2416
    %3080 = vmatprep.mubr.bf16.mxu0 %v1391
    %3081 = vmatmul.mubr.bf16.gmra.mxu0 %v1390
    %v3082 = vpop.f32.mrf.mxu0
    %v3083 = vadd.f32 0.0, %v3082
    %v3084 = vpop.f32.mrf.mxu0
    %v3085 = vpop.f32.mrf.mxu0
    %v3086 = vpop.f32.mrf.mxu0
    %3087 = vdwg.mxu0
    %3088 = vmatprep.subr.bf16.mxu0 0
    %3089 = vmatpush1.bf16.msra.mxu0 %v2521
    %3090 = vmatprep.subr.bf16.mxu0 0
    %3091 = vmatpush1.bf16.msra.mxu0 %v2514
    %3092 = vmatprep.subr.bf16.mxu0 0
    %3093 = vmatpush1.bf16.msra.mxu0 %v2507
    %3094 = vmatprep.subr.bf16.mxu0 0
    %3095 = vmatpush1.bf16.msra.mxu0 %v2500
    %3096 = vmatprep.subr.bf16.mxu0 0
    %3097 = vmatpush1.bf16.msra.mxu0 %v2493
    %3098 = vmatprep.subr.bf16.mxu0 0
    %3099 = vmatpush1.bf16.msra.mxu0 %v2486
    %3100 = vmatprep.subr.bf16.mxu0 0
    %3101 = vmatpush1.bf16.msra.mxu0 %v2479
    %3102 = vmatprep.subr.bf16.mxu0 0
    %3103 = vmatpush1.bf16.msra.mxu0 %v2472
    %3104 = vmatprep.subr.bf16.mxu0 0
    %3105 = vmatpush2.bf16.msra.mxu0 %v2577
    %3106 = vmatprep.subr.bf16.mxu0 0
    %3107 = vmatpush2.bf16.msra.mxu0 %v2570
    %3108 = vmatprep.subr.bf16.mxu0 0
    %3109 = vmatpush2.bf16.msra.mxu0 %v2563
    %3110 = vmatprep.subr.bf16.mxu0 0
    %3111 = vmatpush2.bf16.msra.mxu0 %v2556
    %3112 = vmatprep.subr.bf16.mxu0 0
    %3113 = vmatpush2.bf16.msra.mxu0 %v2549
    %3114 = vmatprep.subr.bf16.mxu0 0
    %3115 = vmatpush2.bf16.msra.mxu0 %v2542
    %3116 = vmatprep.subr.bf16.mxu0 0
    %3117 = vmatpush2.bf16.msra.mxu0 %v2535
    %3118 = vmatprep.subr.bf16.mxu0 0
    %3119 = vmatpush2.bf16.msra.mxu0 %v2528
    %3120 = vmatprep.mubr.bf16.mxu0 %v1393
    %3121 = vmatmul.mubr.bf16.gmra.mxu0 %v1392
    %v3122 = vpop.f32.mrf.mxu0
    %v3123 = vadd.f32 %v3083, %v3122
    %v3124 = vpop.f32.mrf.mxu0
    %v3125 = vpop.f32.mrf.mxu0
    %v3126 = vpop.f32.mrf.mxu0
    %3127 = vdwg.mxu0
    %v3128 = vtanh.pop %v2878
    %v3129 = vtanh.pop %v2880
    %v3130 = vtanh.pop %v2960
    %v3131 = vtanh.pop %v2962
    %v3132 = vtanh.pop %v3042
    %v3133 = vtanh.pop %v3044
    %v3134 = vtanh.pop %v3123
    %v3142 = vcombine.low %v3128, %v3129
    %v3143 = vcombine.low %v3130, %v3131
    %v3145 = vunpack.c.l.s4 1983009808
    %v3146 = vunpack.c.0.s8 %v3145
    %v3147 = vlaneseq
    %v3148 = vshrl.u32 %v3147, 7
    %v3149 = vsub.s32 %v3146, %v3148
    %v3150 = vrot.slane %v3142, %v3149
    %v3152 = vunpack.c.l.s4 1983009808
    %v3153 = vunpack.c.0.s8 %v3152
    %v3154 = vlaneseq
    %v3155 = vshrl.u32 %v3154, 7
    %v3156 = vsub.s32 %v3153, %v3155
    %v3157 = vrot.slane %v3143, %v3156
    %v3158 = vcombine.low %v3150, %v3157
    %v3159 = vcombine.low %v3132, %v3133
    %v3161 = vunpack.c.l.s4 1983009808
    %v3162 = vunpack.c.0.s8 %v3161
    %v3163 = vlaneseq
    %v3164 = vshrl.u32 %v3163, 7
    %v3165 = vsub.s32 %v3162, %v3164
    %v3166 = vrot.slane %v3159, %v3165
    %v3168 = vunpack.c.l.s4 1983009808
    %v3169 = vunpack.c.0.s8 %v3168
    %v3170 = vlaneseq
    %v3171 = vshrl.u32 %v3170, 7
    %v3172 = vsub.s32 %v3169, %v3171
    %v3173 = vrot.slane %v3134, %v3172
    %v3174 = vcombine.low %v3166, %v3173
    %3177 = vst [vmem:[%s8] sm:$0xff] %v3158
    %vm3178 = vcmask 1043458
    %vm3179 = vmor %vm3178, %vm213
    %vm3180 = vcmask 128004
    %vm3181 = vmor %vm3180, %vm3179
    %3182 = vst.msk [vmem:[%s8 + $0x8] sm:$0x3f] %vm3181, %v3174
    // Predicated region
    $region50: #{generator_forward.1} parent=1 // pred_check
      _
    $region51: #{generator_forward.1} parent=1 // pred_check_branch
      %3184 = sbr.rel (0) target = $region53
    $region52: #{generator_forward.1} parent=1 // pred_region
      _
    $region53: #{generator_forward.1} parent=1 // pred_fallthru
      _
    // Predicated region
    $region54: #{generator_forward.1} parent=1 // pred_check
      _
    $region55: #{generator_forward.1} parent=1 // pred_check_branch
      %3186 = sbr.rel (0) target = $region57
    $region56: #{generator_forward.1} parent=1 // pred_region
      _
    $region57: #{generator_forward.1} parent=1 // pred_fallthru
      _
    %3187 = vsyncpa [#allocation3], 1
    %3188 = vsyncpa [#allocation5], 1
    %3189 = vsyncpa [#allocation8], 1

</llo_original>
